<compile_context>
chip_gen: v7x
topology: tpu7x:2x2x1
jax: 0.10.0
libtpu: 0.0.40
codegen_flags: <defaults>
</compile_context>

<pallas_src>
import math

import jax
import jax.numpy as jnp
from jax.experimental import pallas as pl
from jax.experimental.pallas import tpu as pltpu

# --- module-level constants mirrored from the PyTorch file ---
B_J0 = 0.01          # b_j0
BETA = 1.8           # isAdapt = 1
R_M = 1.0
DT = 1.0
TAU_M = 20.0         # args.tau_m (runtime arg in the original; fixed here)
ALPHA = math.exp(-DT / TAU_M)        # exp(-dt / tau_m), scalar
MEM_SCALE = (1.0 - ALPHA) * R_M      # > 0, so folding it into the threshold
                                     # preserves the strict-> comparison


def _round_up(x, m):
    return ((x + m - 1) // m) * m


def lsnn_notd_forward(x, params, *, nb_cap=64):
    """x: (N, input_size * T) flat input (e.g. (N, 784)).  Returns (N, out)."""
    N = x.shape[0]
    d_in = params["w1"].shape[0]
    T = x.shape[1] // d_in
    h1 = params["w1"].shape[1]
    h2 = params["w2"].shape[1]
    h3 = params["w3"].shape[1]
    d_out = params["wo"].shape[1]

    # padded (lane/sublane dense) sizes
    D_IN_PAD = _round_up(d_in, 128)
    H1_PAD = _round_up(h1, 128)
    H2_PAD = _round_up(h2, 128)
    H3_PAD = _round_up(h3, 128)
    DOUT_PAD = _round_up(d_out, 128)

    # batch blocking: NB rows per grid step (multiple of 8), block-streamed.
    NB = min(_round_up(N, 8), nb_cap)
    N_PAD = _round_up(N, NB)
    NUM_B = N_PAD // NB
    M = T * NB                       # rows per time-batched matmul

    # --- input: (N, d_in*T) -> time-major -> per-batch-block (T*NB, D_IN) ---
    xv = x.astype(jnp.float32).reshape(N, d_in, T)
    x_tm = jnp.transpose(xv, (2, 0, 1))                       # (T, N, d_in)
    x_tm = jnp.pad(x_tm, ((0, 0), (0, N_PAD - N), (0, D_IN_PAD - d_in)))
    x_blk = (x_tm.reshape(T, NUM_B, NB, D_IN_PAD)
                 .transpose(1, 0, 2, 3)
                 .reshape(NUM_B, M, D_IN_PAD))                # row r = t*NB + n

    def padw(w, r, c):
        w = w.astype(jnp.float32)
        return jnp.pad(w, ((0, r - w.shape[0]), (0, c - w.shape[1])))

    def padb(b, c):
        b = b.astype(jnp.float32).reshape(1, -1)
        return jnp.pad(b, ((0, 0), (0, c - b.shape[1])))

    # weights stored (in, out); zero-pad to lane-dense shapes.
    w1p = padw(params["w1"], D_IN_PAD, H1_PAD)
    w2p = padw(params["w2"], H1_PAD, H2_PAD)
    w3p = padw(params["w3"], H2_PAD, H3_PAD)
    wop = padw(params["wo"], H3_PAD, DOUT_PAD)
    bop = padb(params["bo"], DOUT_PAD)

    # --- per-timestep thresholds, with MEM_SCALE and biases folded in ---
    # spike_t = (MEM_SCALE*(x@W + bias) - (b_j0 + BETA*ro^(t+1)*b_j0) > 0)
    #         = (x@W > (b_j0 + BETA*ro^(t+1)*b_j0)/MEM_SCALE - bias)
    # Padded lanes get thr = 0; the pre-activation there is exactly 0, and
    # 0 > 0 is False, so padded spike lanes stay 0.
    def make_thr(tau, bias, h_pad):
        ro = jnp.exp(-DT / tau.astype(jnp.float32)).reshape(1, -1)   # (1, h)
        t_exp = jnp.arange(1, T + 1, dtype=jnp.float32).reshape(T, 1)
        b_t = B_J0 * jnp.power(ro, t_exp)                            # (T, h)
        thr = (B_J0 + BETA * b_t) / MEM_SCALE - bias.astype(jnp.float32).reshape(1, -1)
        thr = jnp.pad(thr, ((0, 0), (0, h_pad - thr.shape[1])))
        # expand to the row-blocked layout: row r = t*NB + n -> thr row t
        return jnp.repeat(thr, NB, axis=0)                           # (T*NB, h_pad)

    # fold the (zero) h2h biases into the i2h biases (exact: bh* == 0)
    thr1 = make_thr(params["tau1"], params["bi1"] + params["bh1"], H1_PAD)
    thr2 = make_thr(params["tau2"], params["bi2"] + params["bh2"], H2_PAD)
    thr3 = make_thr(params["tau3"], params["bi3"] + params["bh3"], H3_PAD)

    def kernel(x_ref, w1_ref, w2_ref, w3_ref, wo_ref,
               thr1_ref, thr2_ref, thr3_ref, bo_ref, out_ref):
        f32 = jnp.float32
        xb = x_ref[...]                                              # (M, D_IN_PAD)
        # three time-batched matmuls + compares (spikes are exact 0/1)
        s1 = (jnp.dot(xb, w1_ref[...], preferred_element_type=f32)
              > thr1_ref[...]).astype(f32)
        s2 = (jnp.dot(s1, w2_ref[...], preferred_element_type=f32)
              > thr2_ref[...]).astype(f32)
        s3 = (jnp.dot(s2, w3_ref[...], preferred_element_type=f32)
              > thr3_ref[...]).astype(f32)
        # readout:  sum_t (s3_t @ Wo + bo)  ==  (sum_t s3_t) @ Wo + T*bo
        # tile-aligned reshape (M,H3)->(T,NB,H3); sum over leading axis.
        s3_sum = jnp.sum(s3.reshape(T, NB, H3_PAD), axis=0)          # (NB, H3_PAD)
        out_ref[...] = (jnp.dot(s3_sum, wo_ref[...], preferred_element_type=f32)
                        + jnp.float32(T) * bo_ref[...])

    out_pad = pl.pallas_call(
        kernel,
        out_shape=jax.ShapeDtypeStruct((NUM_B, NB, DOUT_PAD), jnp.float32),
        grid_spec=pltpu.PrefetchScalarGridSpec(
            num_scalar_prefetch=0,
            grid=(NUM_B,),                     # stream batch blocks
            in_specs=[
                pl.BlockSpec((None, M, D_IN_PAD), lambda b: (b, 0, 0)),
                pl.BlockSpec((D_IN_PAD, H1_PAD), lambda b: (0, 0)),
                pl.BlockSpec((H1_PAD, H2_PAD), lambda b: (0, 0)),
                pl.BlockSpec((H2_PAD, H3_PAD), lambda b: (0, 0)),
                pl.BlockSpec((H3_PAD, DOUT_PAD), lambda b: (0, 0)),
                pl.BlockSpec((M, H1_PAD), lambda b: (0, 0)),
                pl.BlockSpec((M, H2_PAD), lambda b: (0, 0)),
                pl.BlockSpec((M, H3_PAD), lambda b: (0, 0)),
                pl.BlockSpec((1, DOUT_PAD), lambda b: (0, 0)),
            ],
            out_specs=pl.BlockSpec((None, NB, DOUT_PAD), lambda b: (b, 0, 0)),
        ),
        compiler_params=pltpu.CompilerParams(
            dimension_semantics=("parallel",)),   # megacore-shardable on v7x
    )(x_blk, w1p, w2p, w3p, wop, thr1, thr2, thr3, bop)

    return out_pad.reshape(N_PAD, DOUT_PAD)[:N, :d_out]


# ---------------- deterministic synthetic parameter init ----------------
def init_params(key, d_in, h1, h2, h3, d_out):
    ks = jax.random.split(key, 7)

    def xavier(k, fan_in, fan_out):
        lim = math.sqrt(6.0 / (fan_in + fan_out))
        return jax.random.uniform(k, (fan_in, fan_out), jnp.float32, -lim, lim)

    def ortho(k, n):
        a = jax.random.normal(k, (n, n), jnp.float32)
        q, _ = jnp.linalg.qr(a)
        return q.astype(jnp.float32)

    return {
        # weights stored as (in, out)
        "w1": xavier(ks[0], d_in, h1), "wh1": ortho(ks[1], h1),
        "w2": xavier(ks[2], h1, h2),   "wh2": ortho(ks[3], h2),
        "w3": xavier(ks[4], h2, h3),   "wh3": ortho(ks[5], h3),
        "wo": xavier(ks[6], h3, d_out),
        # biases init to 0 (as in the module); h2o_3 bias kept 0 for determinism.
        "bi1": jnp.zeros((1, h1), jnp.float32), "bh1": jnp.zeros((1, h1), jnp.float32),
        "bi2": jnp.zeros((1, h2), jnp.float32), "bh2": jnp.zeros((1, h2), jnp.float32),
        "bi3": jnp.zeros((1, h3), jnp.float32), "bh3": jnp.zeros((1, h3), jnp.float32),
        "bo": jnp.zeros((1, d_out), jnp.float32),
        # tau_adp parameters, constant 700
        "tau1": jnp.full((1, h1), 700.0, jnp.float32),
        "tau2": jnp.full((1, h2), 700.0, jnp.float32),
        "tau3": jnp.full((1, h3), 700.0, jnp.float32),
    }


# ---------------- pure-JAX reference (mirrors the PyTorch code) ----------------
# TODO(synk): tau_m is a runtime arg in the original; ALPHA is fixed at tau_m=20 here.
def ref_forward(x, params):
    N = x.shape[0]
    d_in = params["w1"].shape[0]
    T = x.shape[1] // d_in
    xv = x.reshape(N, d_in, T).astype(jnp.float32)
    d_out = params["wo"].shape[1]

    def lin(a, w, b):
        return a @ w + b

    def upd(inp, mem, spk, tau, b):
        ro = jnp.exp(-DT / tau)
        b = ro * b + (1.0 - ro) * spk
        big_b = B_J0 + BETA * b
        mem = mem * ALPHA + (1.0 - ALPHA) * R_M * inp - big_b * spk * DT
        spike = (mem - big_b > 0).astype(jnp.float32)
        return mem, spike, big_b, b

    b_h1 = b_h2 = b_h3 = B_J0
    out_sum = jnp.zeros((N, d_out), jnp.float32)
    for step in range(T):
        z1 = jnp.zeros((N, params["wh1"].shape[0]), jnp.float32)
        z2 = jnp.zeros((N, params["wh2"].shape[0]), jnp.float32)
        z3 = jnp.zeros((N, params["wh3"].shape[0]), jnp.float32)
        ix = xv[:, :, step]
        h1_in = lin(ix, params["w1"], params["bi1"]) + lin(z1, params["wh1"], params["bh1"])
        _, s1, _, b_h1 = upd(h1_in, z1, z1, params["tau1"], b_h1)
        h2_in = lin(s1, params["w2"], params["bi2"]) + lin(z2, params["wh2"], params["bh2"])
        _, s2, _, b_h2 = upd(h2_in, z2, z2, params["tau2"], b_h2)
        h3_in = lin(s2, params["w3"], params["bi3"]) + lin(z3, params["wh3"], params["bh3"])
        _, s3, _, b_h3 = upd(h3_in, z3, z3, params["tau3"], b_h3)
        out_sum = out_sum + lin(s3, params["wo"], params["bo"])
    return out_sum


if __name__ == "__main__":
    key = jax.random.PRNGKey(0)
    kx, kp = jax.random.split(key)

    # small shapes consistent with the module: input_size=28 -> T=28,
    # cfg_fc=(32,32,32), output_size=10, batch N=2
    N = 2
    D_IN, H1, H2, H3, D_OUT = 28, 32, 32, 32, 10

    x = jax.random.uniform(kx, (N, D_IN * (784 // D_IN)), jnp.float32)  # (2, 784)
    params = init_params(kp, D_IN, H1, H2, H3, D_OUT)

    out = lsnn_notd_forward(x, params)
    out = jax.block_until_ready(out)

    ref = ref_forward(x, params)
    assert out.shape == (N, D_OUT)
    assert jnp.allclose(out, ref, atol=1e-4, rtol=1e-4), (out, ref)

    print("KERNEL_OK")
</pallas_src>

<mosaic_0001>
module attributes {stable_mosaic.version = 11 : i64} {
  func.func @kernel(%arg0: i32, %arg1: memref<1x224x128xf32, #tpu.memory_space<vmem>>, %arg2: memref<128x128xf32, #tpu.memory_space<vmem>>, %arg3: memref<128x128xf32, #tpu.memory_space<vmem>>, %arg4: memref<128x128xf32, #tpu.memory_space<vmem>>, %arg5: memref<128x128xf32, #tpu.memory_space<vmem>>, %arg6: memref<224x128xf32, #tpu.memory_space<vmem>>, %arg7: memref<224x128xf32, #tpu.memory_space<vmem>>, %arg8: memref<224x128xf32, #tpu.memory_space<vmem>>, %arg9: memref<1x128xf32, #tpu.memory_space<vmem>>, %arg10: memref<1x8x128xf32, #tpu.memory_space<vmem>>) attributes {dimension_semantics = [#tpu.dimension_semantics<parallel>], iteration_bounds = array<i64: 1>, scalar_prefetch = 0 : i64, scratch_operands = 0 : i64, tpu.core_type = #tpu.core_type<tc>, window_params = [{transform_indices = @transform_0, window_bounds = array<i64: 1, 224, 128>}, {pipeline_mode = #tpu.pipeline_mode<synchronous>, transform_indices = @transform_1, window_bounds = array<i64: 128, 128>}, {pipeline_mode = #tpu.pipeline_mode<synchronous>, transform_indices = @transform_2, window_bounds = array<i64: 128, 128>}, {pipeline_mode = #tpu.pipeline_mode<synchronous>, transform_indices = @transform_3, window_bounds = array<i64: 128, 128>}, {pipeline_mode = #tpu.pipeline_mode<synchronous>, transform_indices = @transform_4, window_bounds = array<i64: 128, 128>}, {pipeline_mode = #tpu.pipeline_mode<synchronous>, transform_indices = @transform_5, window_bounds = array<i64: 224, 128>}, {pipeline_mode = #tpu.pipeline_mode<synchronous>, transform_indices = @transform_6, window_bounds = array<i64: 224, 128>}, {pipeline_mode = #tpu.pipeline_mode<synchronous>, transform_indices = @transform_7, window_bounds = array<i64: 224, 128>}, {pipeline_mode = #tpu.pipeline_mode<synchronous>, transform_indices = @transform_8, window_bounds = array<i64: 1, 128>}, {transform_indices = @transform_9, window_bounds = array<i64: 1, 8, 128>}]} {
    %c0 = arith.constant 0 : index
    %c0_0 = arith.constant 0 : index
    %c0_1 = arith.constant 0 : index
    %0 = vector.load %arg1[%c0, %c0_0, %c0_1] : memref<1x224x128xf32, #tpu.memory_space<vmem>>, vector<1x224x128xf32>
    %1 = vector.shape_cast %0 : vector<1x224x128xf32> to vector<224x128xf32>
    %c0_2 = arith.constant 0 : index
    %c0_3 = arith.constant 0 : index
    %2 = vector.load %arg2[%c0_2, %c0_3] : memref<128x128xf32, #tpu.memory_space<vmem>>, vector<128x128xf32>
    %cst = arith.constant dense<0.000000e+00> : vector<224x128xf32>
    %3 = tpu.matmul %1, %2, %cst {dimension_numbers = #tpu.dot_dimension_numbers<[1], [0], [0], [1], [0, 0, 1, 1], [], []>} : vector<224x128xf32>, vector<128x128xf32>, vector<224x128xf32> -> vector<224x128xf32>
    %c0_4 = arith.constant 0 : index
    %c0_5 = arith.constant 0 : index
    %4 = vector.load %arg6[%c0_4, %c0_5] : memref<224x128xf32, #tpu.memory_space<vmem>>, vector<224x128xf32>
    %5 = arith.cmpf ogt, %3, %4 : vector<224x128xf32>
    %6 = arith.extui %5 : vector<224x128xi1> to vector<224x128xi32>
    %7 = arith.sitofp %6 : vector<224x128xi32> to vector<224x128xf32>
    %c0_6 = arith.constant 0 : index
    %c0_7 = arith.constant 0 : index
    %8 = vector.load %arg3[%c0_6, %c0_7] : memref<128x128xf32, #tpu.memory_space<vmem>>, vector<128x128xf32>
    %cst_8 = arith.constant dense<0.000000e+00> : vector<224x128xf32>
    %9 = tpu.matmul %7, %8, %cst_8 {dimension_numbers = #tpu.dot_dimension_numbers<[1], [0], [0], [1], [0, 0, 1, 1], [], []>} : vector<224x128xf32>, vector<128x128xf32>, vector<224x128xf32> -> vector<224x128xf32>
    %c0_9 = arith.constant 0 : index
    %c0_10 = arith.constant 0 : index
    %10 = vector.load %arg7[%c0_9, %c0_10] : memref<224x128xf32, #tpu.memory_space<vmem>>, vector<224x128xf32>
    %11 = arith.cmpf ogt, %9, %10 : vector<224x128xf32>
    %12 = arith.extui %11 : vector<224x128xi1> to vector<224x128xi32>
    %13 = arith.sitofp %12 : vector<224x128xi32> to vector<224x128xf32>
    %c0_11 = arith.constant 0 : index
    %c0_12 = arith.constant 0 : index
    %14 = vector.load %arg4[%c0_11, %c0_12] : memref<128x128xf32, #tpu.memory_space<vmem>>, vector<128x128xf32>
    %cst_13 = arith.constant dense<0.000000e+00> : vector<224x128xf32>
    %15 = tpu.matmul %13, %14, %cst_13 {dimension_numbers = #tpu.dot_dimension_numbers<[1], [0], [0], [1], [0, 0, 1, 1], [], []>} : vector<224x128xf32>, vector<128x128xf32>, vector<224x128xf32> -> vector<224x128xf32>
    %c0_14 = arith.constant 0 : index
    %c0_15 = arith.constant 0 : index
    %16 = vector.load %arg8[%c0_14, %c0_15] : memref<224x128xf32, #tpu.memory_space<vmem>>, vector<224x128xf32>
    %17 = arith.cmpf ogt, %15, %16 : vector<224x128xf32>
    %18 = arith.extui %17 : vector<224x128xi1> to vector<224x128xi32>
    %19 = arith.sitofp %18 : vector<224x128xi32> to vector<224x128xf32>
    %20 = vector.shape_cast %19 : vector<224x128xf32> to vector<28x8x128xf32>
    %cst_16 = arith.constant dense<0.000000e+00> : vector<8x128xf32>
    %21 = vector.multi_reduction <add>, %20, %cst_16 [0] : vector<28x8x128xf32> to vector<8x128xf32>
    %c0_17 = arith.constant 0 : index
    %c0_18 = arith.constant 0 : index
    %22 = vector.load %arg5[%c0_17, %c0_18] : memref<128x128xf32, #tpu.memory_space<vmem>>, vector<128x128xf32>
    %cst_19 = arith.constant dense<0.000000e+00> : vector<8x128xf32>
    %23 = tpu.matmul %21, %22, %cst_19 {dimension_numbers = #tpu.dot_dimension_numbers<[1], [0], [0], [1], [0, 0, 1, 1], [], []>} : vector<8x128xf32>, vector<128x128xf32>, vector<8x128xf32> -> vector<8x128xf32>
    %c0_20 = arith.constant 0 : index
    %c0_21 = arith.constant 0 : index
    %24 = vector.load %arg9[%c0_20, %c0_21] : memref<1x128xf32, #tpu.memory_space<vmem>>, vector<1x128xf32>
    %cst_22 = arith.constant 2.800000e+01 : f32
    %25 = vector.broadcast %cst_22 : f32 to vector<1x128xf32>
    %26 = arith.mulf %25, %24 : vector<1x128xf32>
    %27 = vector.broadcast %26 : vector<1x128xf32> to vector<8x128xf32>
    %28 = arith.addf %23, %27 : vector<8x128xf32>
    %c0_23 = arith.constant 0 : index
    %c0_24 = arith.constant 0 : index
    %c0_25 = arith.constant 0 : index
    %29 = vector.load %arg10[%c0_23, %c0_24, %c0_25] : memref<1x8x128xf32, #tpu.memory_space<vmem>>, vector<1x8x128xf32>
    %30 = vector.shape_cast %29 : vector<1x8x128xf32> to vector<8x128xf32>
    %31 = vector.shape_cast %28 : vector<8x128xf32> to vector<1x8x128xf32>
    tpu.vector_store %arg10[%c0_23, %c0_24, %c0_25], %31 {strides = array<i32>} : memref<1x8x128xf32, #tpu.memory_space<vmem>>, vector<1x8x128xf32>,
    return
  }
  func.func @transform_0(%arg0: i32) -> (i32, i32, i32) {
    %c0_i32 = arith.constant 0 : i32
    %c0_i32_0 = arith.constant 0 : i32
    %c0_i32_1 = arith.constant 0 : i32
    return %arg0, %c0_i32, %c0_i32_0 : i32, i32, i32
  }
  func.func @transform_1(%arg0: i32) -> (i32, i32) {
    %c0_i32 = arith.constant 0 : i32
    %c0_i32_0 = arith.constant 0 : i32
    %c0_i32_1 = arith.constant 0 : i32
    return %c0_i32, %c0_i32_0 : i32, i32
  }
  func.func @transform_2(%arg0: i32) -> (i32, i32) {
    %c0_i32 = arith.constant 0 : i32
    %c0_i32_0 = arith.constant 0 : i32
    %c0_i32_1 = arith.constant 0 : i32
    return %c0_i32, %c0_i32_0 : i32, i32
  }
  func.func @transform_3(%arg0: i32) -> (i32, i32) {
    %c0_i32 = arith.constant 0 : i32
    %c0_i32_0 = arith.constant 0 : i32
    %c0_i32_1 = arith.constant 0 : i32
    return %c0_i32, %c0_i32_0 : i32, i32
  }
  func.func @transform_4(%arg0: i32) -> (i32, i32) {
    %c0_i32 = arith.constant 0 : i32
    %c0_i32_0 = arith.constant 0 : i32
    %c0_i32_1 = arith.constant 0 : i32
    return %c0_i32, %c0_i32_0 : i32, i32
  }
  func.func @transform_5(%arg0: i32) -> (i32, i32) {
    %c0_i32 = arith.constant 0 : i32
    %c0_i32_0 = arith.constant 0 : i32
    %c0_i32_1 = arith.constant 0 : i32
    return %c0_i32, %c0_i32_0 : i32, i32
  }
  func.func @transform_6(%arg0: i32) -> (i32, i32) {
    %c0_i32 = arith.constant 0 : i32
    %c0_i32_0 = arith.constant 0 : i32
    %c0_i32_1 = arith.constant 0 : i32
    return %c0_i32, %c0_i32_0 : i32, i32
  }
  func.func @transform_7(%arg0: i32) -> (i32, i32) {
    %c0_i32 = arith.constant 0 : i32
    %c0_i32_0 = arith.constant 0 : i32
    %c0_i32_1 = arith.constant 0 : i32
    return %c0_i32, %c0_i32_0 : i32, i32
  }
  func.func @transform_8(%arg0: i32) -> (i32, i32) {
    %c0_i32 = arith.constant 0 : i32
    %c0_i32_0 = arith.constant 0 : i32
    %c0_i32_1 = arith.constant 0 : i32
    return %c0_i32, %c0_i32_0 : i32, i32
  }
  func.func @transform_9(%arg0: i32) -> (i32, i32, i32) {
    %c0_i32 = arith.constant 0 : i32
    %c0_i32_0 = arith.constant 0 : i32
    %c0_i32_1 = arith.constant 0 : i32
    return %arg0, %c0_i32, %c0_i32_0 : i32, i32, i32
  }
}

</mosaic_0001>

<llo_original>
// kernel: tpu_custom_call.1
$region0: #{tpu_custom_call.1}
  #allocation0 [shape = 'u32[]', space=smem, size = 0x4, offset = 0x4, fixed_abs, tag = 'smem constant byte address 0x4 - core index']
  #allocation1 [shape = 'u32[144,128]{1,0:T(1,128)}', space=vmem, size = 0x12000, scoped, tag = 'internal scratch']
  %s0 = inlined_call_operand.hbm [shape: f32[1,224,128], index: 0, kind: input, shape index: {}]
  %s1 = inlined_call_operand.hbm [shape: f32[128,128], index: 1, kind: input, shape index: {}]
  %s2 = inlined_call_operand.hbm [shape: f32[128,128], index: 2, kind: input, shape index: {}]
  %s3 = inlined_call_operand.hbm [shape: f32[128,128], index: 3, kind: input, shape index: {}]
  %s4 = inlined_call_operand.hbm [shape: f32[128,128], index: 4, kind: input, shape index: {}]
  %s5 = inlined_call_operand.hbm [shape: f32[224,128], index: 5, kind: input, shape index: {}]
  %s6 = inlined_call_operand.hbm [shape: f32[224,128], index: 6, kind: input, shape index: {}]
  %s7 = inlined_call_operand.hbm [shape: f32[224,128], index: 7, kind: input, shape index: {}]
  %s8 = inlined_call_operand.vmem [shape: f32[1,128], index: 8, kind: input, shape index: {}]
  %s9 = inlined_call_operand.hbm [shape: f32[1,8,128], index: 9, kind: output, shape index: {}]
  %s10 = sld [smem:[#allocation0]]
  $region78: #{tpu_custom_call.1} parent=0
    _
  %s12 = ssub.s32 1, %s10
  %s13 = scalar_select 0, %s12, %s10
  $region1: #{tpu_custom_call.1} parent=0
    #allocation2 [shape = 'u8[114688]{0}', space=vmem, size = 0x1c000, scoped, tag = 'input window, operand 0, single buffered']
    #allocation3 [shape = 's32[1]{0}', space=sflag, size = 0x4, scoped, tag = 'scoped memory for tpu_custom_call.1']
    #allocation4 [shape = 's32[1]{0}', space=sflag, size = 0x4, scoped, tag = 'scoped memory for tpu_custom_call.1']
    #allocation5 [shape = 'u8[65536]{0}', space=vmem, size = 0x10000, scoped, tag = 'input window, operand 1, single buffered']
    #allocation6 [shape = 's32[1]{0}', space=sflag, size = 0x4, scoped, tag = 'scoped memory for tpu_custom_call.1']
    #allocation7 [shape = 'u8[65536]{0}', space=vmem, size = 0x10000, scoped, tag = 'input window, operand 2, single buffered']
    #allocation8 [shape = 'u8[65536]{0}', space=vmem, size = 0x10000, scoped, tag = 'input window, operand 3, single buffered']
    #allocation9 [shape = 's32[1]{0}', space=sflag, size = 0x4, scoped, tag = 'scoped memory for tpu_custom_call.1']
    #allocation10 [shape = 'u8[65536]{0}', space=vmem, size = 0x10000, scoped, tag = 'input window, operand 4, single buffered']
    #allocation11 [shape = 'u8[114688]{0}', space=vmem, size = 0x1c000, scoped, tag = 'input window, operand 5, single buffered']
    #allocation12 [shape = 's32[1]{0}', space=sflag, size = 0x4, scoped, tag = 'scoped memory for tpu_custom_call.1']
    #allocation13 [shape = 'u8[114688]{0}', space=vmem, size = 0x1c000, scoped, tag = 'input window, operand 6, single buffered']
    #allocation14 [shape = 'u8[114688]{0}', space=vmem, size = 0x1c000, scoped, tag = 'input window, operand 7, single buffered']
    #allocation15 [shape = 's32[1]{0}', space=sflag, size = 0x4, scoped, tag = 'scoped memory for tpu_custom_call.1']
    #allocation16 [shape = 'u8[4096]{0}', space=vmem, size = 0x1000, scoped, tag = 'output window, operand 0, single buffered']
    %14 = vsyncpa [#allocation3], 0
    %15 = vsyncpa [#allocation6], 0
    %16 = vsyncpa [#allocation9], 0
    %17 = vsyncpa [#allocation12], 0
    %18 = vsyncpa [#allocation15], 0
    %19 = vsyncpa [#allocation4], 0
    // Predicated region
    $region2: #{tpu_custom_call.1} parent=1 // pred_check
      _
    $region3: #{tpu_custom_call.1} parent=1 // pred_check_branch
      %21 = sbr.rel (0) target = $region5
    $region4: #{tpu_custom_call.1} parent=1 // pred_region
      %s23 = ssub.s32 3584, 3584
      %24 = vsyncadd [#allocation3], %s23
      %s25 = sshll.u32 [#allocation2], 4
      %s26 = int_to_ptr.vmem [resolvable:$true] %s25
      %31 = dma.hbm_to_vmem [thread:$0]  %s0, 3584, %s26, [#allocation3], 128, 128, 8
    $region5: #{tpu_custom_call.1} parent=1 // pred_fallthru
      _
    // Predicated region
    $region6: #{tpu_custom_call.1} parent=1 // pred_check
      _
    $region7: #{tpu_custom_call.1} parent=1 // pred_check_branch
      %33 = sbr.rel (0) target = $region9
    $region8: #{tpu_custom_call.1} parent=1 // pred_region
      %s35 = ssub.s32 2048, 2048
      %36 = vsyncadd [#allocation6], %s35
      %s37 = sshll.u32 [#allocation5], 4
      %s38 = int_to_ptr.vmem [resolvable:$true] %s37
      %43 = dma.hbm_to_vmem [thread:$0]  %s1, 2048, %s38, [#allocation6], 128, 128, 8
    $region9: #{tpu_custom_call.1} parent=1 // pred_fallthru
      _
    // Predicated region
    $region10: #{tpu_custom_call.1} parent=1 // pred_check
      _
    $region11: #{tpu_custom_call.1} parent=1 // pred_check_branch
      %45 = sbr.rel (0) target = $region13
    $region12: #{tpu_custom_call.1} parent=1 // pred_region
      %s47 = ssub.s32 2048, 2048
      %48 = vsyncadd [#allocation6], %s47
      %s49 = sshll.u32 [#allocation7], 4
      %s50 = int_to_ptr.vmem [resolvable:$true] %s49
      %55 = dma.hbm_to_vmem [thread:$0]  %s2, 2048, %s50, [#allocation6], 128, 128, 8
    $region13: #{tpu_custom_call.1} parent=1 // pred_fallthru
      _
    // Predicated region
    $region14: #{tpu_custom_call.1} parent=1 // pred_check
      _
    $region15: #{tpu_custom_call.1} parent=1 // pred_check_branch
      %57 = sbr.rel (0) target = $region17
    $region16: #{tpu_custom_call.1} parent=1 // pred_region
      %s59 = ssub.s32 2048, 2048
      %60 = vsyncadd [#allocation9], %s59
      %s61 = sshll.u32 [#allocation8], 4
      %s62 = int_to_ptr.vmem [resolvable:$true] %s61
      %67 = dma.hbm_to_vmem [thread:$0]  %s3, 2048, %s62, [#allocation9], 128, 128, 8
    $region17: #{tpu_custom_call.1} parent=1 // pred_fallthru
      _
    // Predicated region
    $region18: #{tpu_custom_call.1} parent=1 // pred_check
      _
    $region19: #{tpu_custom_call.1} parent=1 // pred_check_branch
      %69 = sbr.rel (0) target = $region21
    $region20: #{tpu_custom_call.1} parent=1 // pred_region
      %s71 = ssub.s32 2048, 2048
      %72 = vsyncadd [#allocation9], %s71
      %s73 = sshll.u32 [#allocation10], 4
      %s74 = int_to_ptr.vmem [resolvable:$true] %s73
      %79 = dma.hbm_to_vmem [thread:$0]  %s4, 2048, %s74, [#allocation9], 128, 128, 8
    $region21: #{tpu_custom_call.1} parent=1 // pred_fallthru
      _
    // Predicated region
    $region22: #{tpu_custom_call.1} parent=1 // pred_check
      _
    $region23: #{tpu_custom_call.1} parent=1 // pred_check_branch
      %81 = sbr.rel (0) target = $region25
    $region24: #{tpu_custom_call.1} parent=1 // pred_region
      %s83 = ssub.s32 3584, 3584
      %84 = vsyncadd [#allocation12], %s83
      %s85 = sshll.u32 [#allocation11], 4
      %s86 = int_to_ptr.vmem [resolvable:$true] %s85
      %91 = dma.hbm_to_vmem [thread:$0]  %s5, 3584, %s86, [#allocation12], 128, 128, 8
    $region25: #{tpu_custom_call.1} parent=1 // pred_fallthru
      _
    // Predicated region
    $region26: #{tpu_custom_call.1} parent=1 // pred_check
      _
    $region27: #{tpu_custom_call.1} parent=1 // pred_check_branch
      %93 = sbr.rel (0) target = $region29
    $region28: #{tpu_custom_call.1} parent=1 // pred_region
      %s95 = ssub.s32 3584, 3584
      %96 = vsyncadd [#allocation12], %s95
      %s97 = sshll.u32 [#allocation13], 4
      %s98 = int_to_ptr.vmem [resolvable:$true] %s97
      %103 = dma.hbm_to_vmem [thread:$0]  %s6, 3584, %s98, [#allocation12], 128, 128, 8
    $region29: #{tpu_custom_call.1} parent=1 // pred_fallthru
      _
    // Predicated region
    $region30: #{tpu_custom_call.1} parent=1 // pred_check
      _
    $region31: #{tpu_custom_call.1} parent=1 // pred_check_branch
      %105 = sbr.rel (0) target = $region33
    $region32: #{tpu_custom_call.1} parent=1 // pred_region
      %s107 = ssub.s32 3584, 3584
      %108 = vsyncadd [#allocation15], %s107
      %s109 = sshll.u32 [#allocation14], 4
      %s110 = int_to_ptr.vmem [resolvable:$true] %s109
      %115 = dma.hbm_to_vmem [thread:$0]  %s7, 3584, %s110, [#allocation15], 128, 128, 8
    $region33: #{tpu_custom_call.1} parent=1 // pred_fallthru
      _
    // Predicated region
    $region34: #{tpu_custom_call.1} parent=1 // pred_check
      _
    $region35: #{tpu_custom_call.1} parent=1 // pred_check_branch
      %117 = sbr.rel (0) target = $region37
    $region36: #{tpu_custom_call.1} parent=1 // pred_region
      _
    $region37: #{tpu_custom_call.1} parent=1 // pred_fallthru
      _
    // Predicated region
    $region38: #{tpu_custom_call.1} parent=1 // pred_check
      _
    $region39: #{tpu_custom_call.1} parent=1 // pred_check_branch
      %119 = sbr.rel (0) target = $region41
    $region40: #{tpu_custom_call.1} parent=1 // pred_region
      %120 = dma.done [#allocation3], 3584
    $region41: #{tpu_custom_call.1} parent=1 // pred_fallthru
      _
    // Predicated region
    $region42: #{tpu_custom_call.1} parent=1 // pred_check
      _
    $region43: #{tpu_custom_call.1} parent=1 // pred_check_branch
      %122 = sbr.rel (0) target = $region45
    $region44: #{tpu_custom_call.1} parent=1 // pred_region
      %123 = dma.done [#allocation6], 2048
    $region45: #{tpu_custom_call.1} parent=1 // pred_fallthru
      _
    // Predicated region
    $region46: #{tpu_custom_call.1} parent=1 // pred_check
      _
    $region47: #{tpu_custom_call.1} parent=1 // pred_check_branch
      %125 = sbr.rel (0) target = $region49
    $region48: #{tpu_custom_call.1} parent=1 // pred_region
      %126 = dma.done [#allocation6], 2048
    $region49: #{tpu_custom_call.1} parent=1 // pred_fallthru
      _
    // Predicated region
    $region50: #{tpu_custom_call.1} parent=1 // pred_check
      _
    $region51: #{tpu_custom_call.1} parent=1 // pred_check_branch
      %128 = sbr.rel (0) target = $region53
    $region52: #{tpu_custom_call.1} parent=1 // pred_region
      %129 = dma.done [#allocation9], 2048
    $region53: #{tpu_custom_call.1} parent=1 // pred_fallthru
      _
    // Predicated region
    $region54: #{tpu_custom_call.1} parent=1 // pred_check
      _
    $region55: #{tpu_custom_call.1} parent=1 // pred_check_branch
      %131 = sbr.rel (0) target = $region57
    $region56: #{tpu_custom_call.1} parent=1 // pred_region
      %132 = dma.done [#allocation9], 2048
    $region57: #{tpu_custom_call.1} parent=1 // pred_fallthru
      _
    // Predicated region
    $region58: #{tpu_custom_call.1} parent=1 // pred_check
      _
    $region59: #{tpu_custom_call.1} parent=1 // pred_check_branch
      %134 = sbr.rel (0) target = $region61
    $region60: #{tpu_custom_call.1} parent=1 // pred_region
      %135 = dma.done [#allocation12], 3584
    $region61: #{tpu_custom_call.1} parent=1 // pred_fallthru
      _
    // Predicated region
    $region62: #{tpu_custom_call.1} parent=1 // pred_check
      _
    $region63: #{tpu_custom_call.1} parent=1 // pred_check_branch
      %137 = sbr.rel (0) target = $region65
    $region64: #{tpu_custom_call.1} parent=1 // pred_region
      %138 = dma.done [#allocation12], 3584
    $region65: #{tpu_custom_call.1} parent=1 // pred_fallthru
      _
    // Predicated region
    $region66: #{tpu_custom_call.1} parent=1 // pred_check
      _
    $region67: #{tpu_custom_call.1} parent=1 // pred_check_branch
      %140 = sbr.rel (0) target = $region69
    $region68: #{tpu_custom_call.1} parent=1 // pred_region
      %141 = dma.done [#allocation15], 3584
    $region69: #{tpu_custom_call.1} parent=1 // pred_fallthru
      _
    %v142 = vld [vmem:[#allocation2] sm:$0xff]
    %v143 = vld [vmem:[#allocation2 + $0x8] sm:$0xff]
    %v144 = vld [vmem:[#allocation2 + $0x10] sm:$0xff]
    %v145 = vld [vmem:[#allocation2 + $0x18] sm:$0xff]
    %v146 = vld [vmem:[#allocation2 + $0x20] sm:$0xff]
    %v147 = vld [vmem:[#allocation2 + $0x28] sm:$0xff]
    %v148 = vld [vmem:[#allocation2 + $0x30] sm:$0xff]
    %v149 = vld [vmem:[#allocation2 + $0x38] sm:$0xff]
    %v150 = vld [vmem:[#allocation2 + $0x40] sm:$0xff]
    %v151 = vld [vmem:[#allocation2 + $0x48] sm:$0xff]
    %v152 = vld [vmem:[#allocation2 + $0x50] sm:$0xff]
    %v153 = vld [vmem:[#allocation2 + $0x58] sm:$0xff]
    %v154 = vld [vmem:[#allocation2 + $0x60] sm:$0xff]
    %v155 = vld [vmem:[#allocation2 + $0x68] sm:$0xff]
    %v156 = vld [vmem:[#allocation2 + $0x70] sm:$0xff]
    %v157 = vld [vmem:[#allocation2 + $0x78] sm:$0xff]
    %v158 = vld [vmem:[#allocation2 + $0x80] sm:$0xff]
    %v159 = vld [vmem:[#allocation2 + $0x88] sm:$0xff]
    %v160 = vld [vmem:[#allocation2 + $0x90] sm:$0xff]
    %v161 = vld [vmem:[#allocation2 + $0x98] sm:$0xff]
    %v162 = vld [vmem:[#allocation2 + $0xa0] sm:$0xff]
    %v163 = vld [vmem:[#allocation2 + $0xa8] sm:$0xff]
    %v164 = vld [vmem:[#allocation2 + $0xb0] sm:$0xff]
    %v165 = vld [vmem:[#allocation2 + $0xb8] sm:$0xff]
    %v166 = vld [vmem:[#allocation2 + $0xc0] sm:$0xff]
    %v167 = vld [vmem:[#allocation2 + $0xc8] sm:$0xff]
    %v168 = vld [vmem:[#allocation2 + $0xd0] sm:$0xff]
    %v169 = vld [vmem:[#allocation2 + $0xd8] sm:$0xff]
    %v170 = vld [vmem:[#allocation5] sm:$0xff]
    %v171 = vld [vmem:[#allocation5 + $0x8] sm:$0xff]
    %v172 = vld [vmem:[#allocation5 + $0x10] sm:$0xff]
    %v173 = vld [vmem:[#allocation5 + $0x18] sm:$0xff]
    %v174 = vld [vmem:[#allocation5 + $0x20] sm:$0xff]
    %v175 = vld [vmem:[#allocation5 + $0x28] sm:$0xff]
    %v176 = vld [vmem:[#allocation5 + $0x30] sm:$0xff]
    %v177 = vld [vmem:[#allocation5 + $0x38] sm:$0xff]
    %v178 = vld [vmem:[#allocation5 + $0x40] sm:$0xff]
    %v179 = vld [vmem:[#allocation5 + $0x48] sm:$0xff]
    %v180 = vld [vmem:[#allocation5 + $0x50] sm:$0xff]
    %v181 = vld [vmem:[#allocation5 + $0x58] sm:$0xff]
    %v182 = vld [vmem:[#allocation5 + $0x60] sm:$0xff]
    %v183 = vld [vmem:[#allocation5 + $0x68] sm:$0xff]
    %v184 = vld [vmem:[#allocation5 + $0x70] sm:$0xff]
    %v185 = vld [vmem:[#allocation5 + $0x78] sm:$0xff]
    %186 = vmatprep.subr.mxu0 0.0
    %187 = vmatpush1.msra.mxu0 %v170
    %188 = vmatprep.subr.mxu0 0.0
    %189 = vmatpush1.msra.mxu0 %v171
    %190 = vmatprep.subr.mxu0 0.0
    %191 = vmatpush1.msra.mxu0 %v172
    %192 = vmatprep.subr.mxu0 0.0
    %193 = vmatpush1.msra.mxu0 %v173
    %194 = vmatprep.subr.mxu0 0.0
    %195 = vmatpush1.msra.mxu0 %v174
    %196 = vmatprep.subr.mxu0 0.0
    %197 = vmatpush1.msra.mxu0 %v175
    %198 = vmatprep.subr.mxu0 0.0
    %199 = vmatpush1.msra.mxu0 %v176
    %200 = vmatprep.subr.mxu0 0.0
    %201 = vmatpush1.msra.mxu0 %v177
    %202 = vmatprep.subr.mxu0 0.0
    %203 = vmatpush1.msra.mxu0 %v178
    %204 = vmatprep.subr.mxu0 0.0
    %205 = vmatpush1.msra.mxu0 %v179
    %206 = vmatprep.subr.mxu0 0.0
    %207 = vmatpush1.msra.mxu0 %v180
    %208 = vmatprep.subr.mxu0 0.0
    %209 = vmatpush1.msra.mxu0 %v181
    %210 = vmatprep.subr.mxu0 0.0
    %211 = vmatpush1.msra.mxu0 %v182
    %212 = vmatprep.subr.mxu0 0.0
    %213 = vmatpush1.msra.mxu0 %v183
    %214 = vmatprep.subr.mxu0 0.0
    %215 = vmatpush1.msra.mxu0 %v184
    %216 = vmatprep.subr.mxu0 0.0
    %217 = vmatpush1.msra.mxu0 %v185
    %218 = vmatprep.subr.mxu0 0.0
    %219 = vmatpush1.msra.mxu0 0.0
    %220 = vmatprep.subr.mxu0 0.0
    %221 = vmatpush1.msra.mxu0 0.0
    %222 = vmatprep.subr.mxu0 0.0
    %223 = vmatpush1.msra.mxu0 0.0
    %224 = vmatprep.subr.mxu0 0.0
    %225 = vmatpush1.msra.mxu0 0.0
    %226 = vmatprep.subr.mxu0 0.0
    %227 = vmatpush1.msra.mxu0 0.0
    %228 = vmatprep.subr.mxu0 0.0
    %229 = vmatpush1.msra.mxu0 0.0
    %230 = vmatprep.subr.mxu0 0.0
    %231 = vmatpush1.msra.mxu0 0.0
    %232 = vmatprep.subr.mxu0 0.0
    %233 = vmatpush1.msra.mxu0 0.0
    %234 = vmatprep.subr.mxu0 0.0
    %235 = vmatpush1.msra.mxu0 0.0
    %236 = vmatprep.subr.mxu0 0.0
    %237 = vmatpush1.msra.mxu0 0.0
    %238 = vmatprep.subr.mxu0 0.0
    %239 = vmatpush1.msra.mxu0 0.0
    %240 = vmatprep.subr.mxu0 0.0
    %241 = vmatpush1.msra.mxu0 0.0
    %242 = vmatprep.subr.mxu0 0.0
    %243 = vmatpush1.msra.mxu0 0.0
    %244 = vmatprep.subr.mxu0 0.0
    %245 = vmatpush1.msra.mxu0 0.0
    %246 = vmatprep.subr.mxu0 0.0
    %247 = vmatpush1.msra.mxu0 0.0
    %248 = vmatprep.subr.mxu0 0.0
    %249 = vmatpush1.msra.mxu0 0.0
    %250 = vmatprep.mubr.f32.mxu0 0.0
    %251 = vmatmul.mubr.f32.gmra.mrb[0].mxu0 %v142
    %v252 = vpop.f32.mrb[0].mxu0
    %v253 = vadd.f32 0.0, %v252
    %v254 = vpop.f32.mrb[0].mxu0
    %255 = vmatprep.mubr.f32.mxu0 0.0
    %256 = vmatmul.mubr.f32.gmra.mrb[0].mxu0 %v143
    %v257 = vpop.f32.mrb[0].mxu0
    %v258 = vadd.f32 0.0, %v257
    %v259 = vpop.f32.mrb[0].mxu0
    %260 = vmatprep.mubr.f32.mxu0 0.0
    %261 = vmatmul.mubr.f32.gmra.mrb[0].mxu0 %v144
    %v262 = vpop.f32.mrb[0].mxu0
    %v263 = vadd.f32 0.0, %v262
    %v264 = vpop.f32.mrb[0].mxu0
    %265 = vmatprep.mubr.f32.mxu0 0.0
    %266 = vmatmul.mubr.f32.gmra.mrb[0].mxu0 %v145
    %v267 = vpop.f32.mrb[0].mxu0
    %v268 = vadd.f32 0.0, %v267
    %v269 = vpop.f32.mrb[0].mxu0
    %270 = vmatprep.mubr.f32.mxu0 0.0
    %271 = vmatmul.mubr.f32.gmra.mrb[0].mxu0 %v146
    %v272 = vpop.f32.mrb[0].mxu0
    %v273 = vadd.f32 0.0, %v272
    %v274 = vpop.f32.mrb[0].mxu0
    %275 = vmatprep.mubr.f32.mxu0 0.0
    %276 = vmatmul.mubr.f32.gmra.mrb[0].mxu0 %v147
    %v277 = vpop.f32.mrb[0].mxu0
    %v278 = vadd.f32 0.0, %v277
    %v279 = vpop.f32.mrb[0].mxu0
    %280 = vmatprep.mubr.f32.mxu0 0.0
    %281 = vmatmul.mubr.f32.gmra.mrb[0].mxu0 %v148
    %v282 = vpop.f32.mrb[0].mxu0
    %v283 = vadd.f32 0.0, %v282
    %v284 = vpop.f32.mrb[0].mxu0
    %285 = vmatprep.mubr.f32.mxu0 0.0
    %286 = vmatmul.mubr.f32.gmra.mrb[0].mxu0 %v149
    %v287 = vpop.f32.mrb[0].mxu0
    %v288 = vadd.f32 0.0, %v287
    %v289 = vpop.f32.mrb[0].mxu0
    %290 = vmatprep.mubr.f32.mxu0 0.0
    %291 = vmatmul.mubr.f32.gmra.mrb[0].mxu0 %v150
    %v292 = vpop.f32.mrb[0].mxu0
    %v293 = vadd.f32 0.0, %v292
    %v294 = vpop.f32.mrb[0].mxu0
    %295 = vmatprep.mubr.f32.mxu0 0.0
    %296 = vmatmul.mubr.f32.gmra.mrb[0].mxu0 %v151
    %v297 = vpop.f32.mrb[0].mxu0
    %v298 = vadd.f32 0.0, %v297
    %v299 = vpop.f32.mrb[0].mxu0
    %300 = vmatprep.mubr.f32.mxu0 0.0
    %301 = vmatmul.mubr.f32.gmra.mrb[0].mxu0 %v152
    %v302 = vpop.f32.mrb[0].mxu0
    %v303 = vadd.f32 0.0, %v302
    %v304 = vpop.f32.mrb[0].mxu0
    %305 = vmatprep.mubr.f32.mxu0 0.0
    %306 = vmatmul.mubr.f32.gmra.mrb[0].mxu0 %v153
    %v307 = vpop.f32.mrb[0].mxu0
    %v308 = vadd.f32 0.0, %v307
    %v309 = vpop.f32.mrb[0].mxu0
    %310 = vmatprep.mubr.f32.mxu0 0.0
    %311 = vmatmul.mubr.f32.gmra.mrb[0].mxu0 %v154
    %v312 = vpop.f32.mrb[0].mxu0
    %v313 = vadd.f32 0.0, %v312
    %v314 = vpop.f32.mrb[0].mxu0
    %315 = vmatprep.mubr.f32.mxu0 0.0
    %316 = vmatmul.mubr.f32.gmra.mrb[0].mxu0 %v155
    %v317 = vpop.f32.mrb[0].mxu0
    %v318 = vadd.f32 0.0, %v317
    %v319 = vpop.f32.mrb[0].mxu0
    %320 = vmatprep.mubr.f32.mxu0 0.0
    %321 = vmatmul.mubr.f32.gmra.mrb[0].mxu0 %v156
    %v322 = vpop.f32.mrb[0].mxu0
    %v323 = vadd.f32 0.0, %v322
    %v324 = vpop.f32.mrb[0].mxu0
    %325 = vmatprep.mubr.f32.mxu0 0.0
    %326 = vmatmul.mubr.f32.gmra.mrb[0].mxu0 %v157
    %v327 = vpop.f32.mrb[0].mxu0
    %v328 = vadd.f32 0.0, %v327
    %v329 = vpop.f32.mrb[0].mxu0
    %330 = vmatprep.mubr.f32.mxu0 0.0
    %331 = vmatmul.mubr.f32.gmra.mrb[0].mxu0 %v158
    %v332 = vpop.f32.mrb[0].mxu0
    %v333 = vadd.f32 0.0, %v332
    %v334 = vpop.f32.mrb[0].mxu0
    %335 = vmatprep.mubr.f32.mxu0 0.0
    %336 = vmatmul.mubr.f32.gmra.mrb[0].mxu0 %v159
    %v337 = vpop.f32.mrb[0].mxu0
    %v338 = vadd.f32 0.0, %v337
    %v339 = vpop.f32.mrb[0].mxu0
    %340 = vmatprep.mubr.f32.mxu0 0.0
    %341 = vmatmul.mubr.f32.gmra.mrb[0].mxu0 %v160
    %v342 = vpop.f32.mrb[0].mxu0
    %v343 = vadd.f32 0.0, %v342
    %v344 = vpop.f32.mrb[0].mxu0
    %345 = vmatprep.mubr.f32.mxu0 0.0
    %346 = vmatmul.mubr.f32.gmra.mrb[0].mxu0 %v161
    %v347 = vpop.f32.mrb[0].mxu0
    %v348 = vadd.f32 0.0, %v347
    %v349 = vpop.f32.mrb[0].mxu0
    %350 = vmatprep.mubr.f32.mxu0 0.0
    %351 = vmatmul.mubr.f32.gmra.mrb[0].mxu0 %v162
    %v352 = vpop.f32.mrb[0].mxu0
    %v353 = vadd.f32 0.0, %v352
    %v354 = vpop.f32.mrb[0].mxu0
    %355 = vmatprep.mubr.f32.mxu0 0.0
    %356 = vmatmul.mubr.f32.gmra.mrb[0].mxu0 %v163
    %v357 = vpop.f32.mrb[0].mxu0
    %v358 = vadd.f32 0.0, %v357
    %v359 = vpop.f32.mrb[0].mxu0
    %360 = vmatprep.mubr.f32.mxu0 0.0
    %361 = vmatmul.mubr.f32.gmra.mrb[0].mxu0 %v164
    %v362 = vpop.f32.mrb[0].mxu0
    %v363 = vadd.f32 0.0, %v362
    %v364 = vpop.f32.mrb[0].mxu0
    %365 = vmatprep.mubr.f32.mxu0 0.0
    %366 = vmatmul.mubr.f32.gmra.mrb[0].mxu0 %v165
    %v367 = vpop.f32.mrb[0].mxu0
    %v368 = vadd.f32 0.0, %v367
    %v369 = vpop.f32.mrb[0].mxu0
    %370 = vmatprep.mubr.f32.mxu0 0.0
    %371 = vmatmul.mubr.f32.gmra.mrb[0].mxu0 %v166
    %v372 = vpop.f32.mrb[0].mxu0
    %v373 = vadd.f32 0.0, %v372
    %v374 = vpop.f32.mrb[0].mxu0
    %375 = vmatprep.mubr.f32.mxu0 0.0
    %376 = vmatmul.mubr.f32.gmra.mrb[0].mxu0 %v167
    %v377 = vpop.f32.mrb[0].mxu0
    %v378 = vadd.f32 0.0, %v377
    %v379 = vpop.f32.mrb[0].mxu0
    %380 = vmatprep.mubr.f32.mxu0 0.0
    %381 = vmatmul.mubr.f32.gmra.mrb[0].mxu0 %v168
    %v382 = vpop.f32.mrb[0].mxu0
    %v383 = vadd.f32 0.0, %v382
    %v384 = vpop.f32.mrb[0].mxu0
    %385 = vmatprep.mubr.f32.mxu0 0.0
    %386 = vmatmul.mubr.f32.gmra.mrb[0].mxu0 %v169
    %v387 = vpop.f32.mrb[0].mxu0
    %v388 = vadd.f32 0.0, %v387
    %v389 = vpop.f32.mrb[0].mxu0
    %390 = vdwg.mxu0
    %v391 = vld [vmem:[#allocation11] sm:$0xff]
    %v392 = vld [vmem:[#allocation11 + $0x8] sm:$0xff]
    %v393 = vld [vmem:[#allocation11 + $0x10] sm:$0xff]
    %v394 = vld [vmem:[#allocation11 + $0x18] sm:$0xff]
    %v395 = vld [vmem:[#allocation11 + $0x20] sm:$0xff]
    %v396 = vld [vmem:[#allocation11 + $0x28] sm:$0xff]
    %v397 = vld [vmem:[#allocation11 + $0x30] sm:$0xff]
    %v398 = vld [vmem:[#allocation11 + $0x38] sm:$0xff]
    %v399 = vld [vmem:[#allocation11 + $0x40] sm:$0xff]
    %v400 = vld [vmem:[#allocation11 + $0x48] sm:$0xff]
    %v401 = vld [vmem:[#allocation11 + $0x50] sm:$0xff]
    %v402 = vld [vmem:[#allocation11 + $0x58] sm:$0xff]
    %v403 = vld [vmem:[#allocation11 + $0x60] sm:$0xff]
    %v404 = vld [vmem:[#allocation11 + $0x68] sm:$0xff]
    %v405 = vld [vmem:[#allocation11 + $0x70] sm:$0xff]
    %v406 = vld [vmem:[#allocation11 + $0x78] sm:$0xff]
    %v407 = vld [vmem:[#allocation11 + $0x80] sm:$0xff]
    %v408 = vld [vmem:[#allocation11 + $0x88] sm:$0xff]
    %v409 = vld [vmem:[#allocation11 + $0x90] sm:$0xff]
    %v410 = vld [vmem:[#allocation11 + $0x98] sm:$0xff]
    %v411 = vld [vmem:[#allocation11 + $0xa0] sm:$0xff]
    %v412 = vld [vmem:[#allocation11 + $0xa8] sm:$0xff]
    %v413 = vld [vmem:[#allocation11 + $0xb0] sm:$0xff]
    %v414 = vld [vmem:[#allocation11 + $0xb8] sm:$0xff]
    %v415 = vld [vmem:[#allocation11 + $0xc0] sm:$0xff]
    %v416 = vld [vmem:[#allocation11 + $0xc8] sm:$0xff]
    %v417 = vld [vmem:[#allocation11 + $0xd0] sm:$0xff]
    %v418 = vld [vmem:[#allocation11 + $0xd8] sm:$0xff]
    %vm419 = vcmp.gt.f32.partialorder %v253, %v391
    %vm420 = vcmp.gt.f32.partialorder %v258, %v392
    %vm421 = vcmp.gt.f32.partialorder %v263, %v393
    %vm422 = vcmp.gt.f32.partialorder %v268, %v394
    %vm423 = vcmp.gt.f32.partialorder %v273, %v395
    %vm424 = vcmp.gt.f32.partialorder %v278, %v396
    %vm425 = vcmp.gt.f32.partialorder %v283, %v397
    %vm426 = vcmp.gt.f32.partialorder %v288, %v398
    %vm427 = vcmp.gt.f32.partialorder %v293, %v399
    %vm428 = vcmp.gt.f32.partialorder %v298, %v400
    %vm429 = vcmp.gt.f32.partialorder %v303, %v401
    %vm430 = vcmp.gt.f32.partialorder %v308, %v402
    %vm431 = vcmp.gt.f32.partialorder %v313, %v403
    %vm432 = vcmp.gt.f32.partialorder %v318, %v404
    %vm433 = vcmp.gt.f32.partialorder %v323, %v405
    %vm434 = vcmp.gt.f32.partialorder %v328, %v406
    %vm435 = vcmp.gt.f32.partialorder %v333, %v407
    %vm436 = vcmp.gt.f32.partialorder %v338, %v408
    %vm437 = vcmp.gt.f32.partialorder %v343, %v409
    %vm438 = vcmp.gt.f32.partialorder %v348, %v410
    %vm439 = vcmp.gt.f32.partialorder %v353, %v411
    %vm440 = vcmp.gt.f32.partialorder %v358, %v412
    %vm441 = vcmp.gt.f32.partialorder %v363, %v413
    %vm442 = vcmp.gt.f32.partialorder %v368, %v414
    %vm443 = vcmp.gt.f32.partialorder %v373, %v415
    %vm444 = vcmp.gt.f32.partialorder %v378, %v416
    %vm445 = vcmp.gt.f32.partialorder %v383, %v417
    %vm446 = vcmp.gt.f32.partialorder %v388, %v418
    %v447 = vsel %vm419, 1, 0
    %v448 = vsel %vm420, 1, 0
    %v449 = vsel %vm421, 1, 0
    %v450 = vsel %vm422, 1, 0
    %v451 = vsel %vm423, 1, 0
    %v452 = vsel %vm424, 1, 0
    %v453 = vsel %vm425, 1, 0
    %v454 = vsel %vm426, 1, 0
    %v455 = vsel %vm427, 1, 0
    %v456 = vsel %vm428, 1, 0
    %v457 = vsel %vm429, 1, 0
    %v458 = vsel %vm430, 1, 0
    %v459 = vsel %vm431, 1, 0
    %v460 = vsel %vm432, 1, 0
    %v461 = vsel %vm433, 1, 0
    %v462 = vsel %vm434, 1, 0
    %v463 = vsel %vm435, 1, 0
    %v464 = vsel %vm436, 1, 0
    %v465 = vsel %vm437, 1, 0
    %v466 = vsel %vm438, 1, 0
    %v467 = vsel %vm439, 1, 0
    %v468 = vsel %vm440, 1, 0
    %v469 = vsel %vm441, 1, 0
    %v470 = vsel %vm442, 1, 0
    %v471 = vsel %vm443, 1, 0
    %v472 = vsel %vm444, 1, 0
    %v473 = vsel %vm445, 1, 0
    %v474 = vsel %vm446, 1, 0
    %v475 = vcvt.s32.f32 %v447
    %v476 = vcvt.s32.f32 %v448
    %v477 = vcvt.s32.f32 %v449
    %v478 = vcvt.s32.f32 %v450
    %v479 = vcvt.s32.f32 %v451
    %v480 = vcvt.s32.f32 %v452
    %v481 = vcvt.s32.f32 %v453
    %v482 = vcvt.s32.f32 %v454
    %v483 = vcvt.s32.f32 %v455
    %v484 = vcvt.s32.f32 %v456
    %v485 = vcvt.s32.f32 %v457
    %v486 = vcvt.s32.f32 %v458
    %v487 = vcvt.s32.f32 %v459
    %v488 = vcvt.s32.f32 %v460
    %v489 = vcvt.s32.f32 %v461
    %v490 = vcvt.s32.f32 %v462
    %v491 = vcvt.s32.f32 %v463
    %v492 = vcvt.s32.f32 %v464
    %v493 = vcvt.s32.f32 %v465
    %v494 = vcvt.s32.f32 %v466
    %v495 = vcvt.s32.f32 %v467
    %v496 = vcvt.s32.f32 %v468
    %v497 = vcvt.s32.f32 %v469
    %v498 = vcvt.s32.f32 %v470
    %v499 = vcvt.s32.f32 %v471
    %v500 = vcvt.s32.f32 %v472
    %v501 = vcvt.s32.f32 %v473
    %v502 = vcvt.s32.f32 %v474
    %v503 = vld [vmem:[#allocation7] sm:$0xff]
    %v504 = vld [vmem:[#allocation7 + $0x8] sm:$0xff]
    %v505 = vld [vmem:[#allocation7 + $0x10] sm:$0xff]
    %v506 = vld [vmem:[#allocation7 + $0x18] sm:$0xff]
    %v507 = vld [vmem:[#allocation7 + $0x20] sm:$0xff]
    %v508 = vld [vmem:[#allocation7 + $0x28] sm:$0xff]
    %v509 = vld [vmem:[#allocation7 + $0x30] sm:$0xff]
    %v510 = vld [vmem:[#allocation7 + $0x38] sm:$0xff]
    %v511 = vld [vmem:[#allocation7 + $0x40] sm:$0xff]
    %v512 = vld [vmem:[#allocation7 + $0x48] sm:$0xff]
    %v513 = vld [vmem:[#allocation7 + $0x50] sm:$0xff]
    %v514 = vld [vmem:[#allocation7 + $0x58] sm:$0xff]
    %v515 = vld [vmem:[#allocation7 + $0x60] sm:$0xff]
    %v516 = vld [vmem:[#allocation7 + $0x68] sm:$0xff]
    %v517 = vld [vmem:[#allocation7 + $0x70] sm:$0xff]
    %v518 = vld [vmem:[#allocation7 + $0x78] sm:$0xff]
    %519 = vmatprep.subr.mxu0 0.0
    %520 = vmatpush1.msra.mxu0 %v503
    %521 = vmatprep.subr.mxu0 0.0
    %522 = vmatpush1.msra.mxu0 %v504
    %523 = vmatprep.subr.mxu0 0.0
    %524 = vmatpush1.msra.mxu0 %v505
    %525 = vmatprep.subr.mxu0 0.0
    %526 = vmatpush1.msra.mxu0 %v506
    %527 = vmatprep.subr.mxu0 0.0
    %528 = vmatpush1.msra.mxu0 %v507
    %529 = vmatprep.subr.mxu0 0.0
    %530 = vmatpush1.msra.mxu0 %v508
    %531 = vmatprep.subr.mxu0 0.0
    %532 = vmatpush1.msra.mxu0 %v509
    %533 = vmatprep.subr.mxu0 0.0
    %534 = vmatpush1.msra.mxu0 %v510
    %535 = vmatprep.subr.mxu0 0.0
    %536 = vmatpush1.msra.mxu0 %v511
    %537 = vmatprep.subr.mxu0 0.0
    %538 = vmatpush1.msra.mxu0 %v512
    %539 = vmatprep.subr.mxu0 0.0
    %540 = vmatpush1.msra.mxu0 %v513
    %541 = vmatprep.subr.mxu0 0.0
    %542 = vmatpush1.msra.mxu0 %v514
    %543 = vmatprep.subr.mxu0 0.0
    %544 = vmatpush1.msra.mxu0 %v515
    %545 = vmatprep.subr.mxu0 0.0
    %546 = vmatpush1.msra.mxu0 %v516
    %547 = vmatprep.subr.mxu0 0.0
    %548 = vmatpush1.msra.mxu0 %v517
    %549 = vmatprep.subr.mxu0 0.0
    %550 = vmatpush1.msra.mxu0 %v518
    %551 = vmatprep.subr.mxu0 0.0
    %552 = vmatpush1.msra.mxu0 0.0
    %553 = vmatprep.subr.mxu0 0.0
    %554 = vmatpush1.msra.mxu0 0.0
    %555 = vmatprep.subr.mxu0 0.0
    %556 = vmatpush1.msra.mxu0 0.0
    %557 = vmatprep.subr.mxu0 0.0
    %558 = vmatpush1.msra.mxu0 0.0
    %559 = vmatprep.subr.mxu0 0.0
    %560 = vmatpush1.msra.mxu0 0.0
    %561 = vmatprep.subr.mxu0 0.0
    %562 = vmatpush1.msra.mxu0 0.0
    %563 = vmatprep.subr.mxu0 0.0
    %564 = vmatpush1.msra.mxu0 0.0
    %565 = vmatprep.subr.mxu0 0.0
    %566 = vmatpush1.msra.mxu0 0.0
    %567 = vmatprep.subr.mxu0 0.0
    %568 = vmatpush1.msra.mxu0 0.0
    %569 = vmatprep.subr.mxu0 0.0
    %570 = vmatpush1.msra.mxu0 0.0
    %571 = vmatprep.subr.mxu0 0.0
    %572 = vmatpush1.msra.mxu0 0.0
    %573 = vmatprep.subr.mxu0 0.0
    %574 = vmatpush1.msra.mxu0 0.0
    %575 = vmatprep.subr.mxu0 0.0
    %576 = vmatpush1.msra.mxu0 0.0
    %577 = vmatprep.subr.mxu0 0.0
    %578 = vmatpush1.msra.mxu0 0.0
    %579 = vmatprep.subr.mxu0 0.0
    %580 = vmatpush1.msra.mxu0 0.0
    %581 = vmatprep.subr.mxu0 0.0
    %582 = vmatpush1.msra.mxu0 0.0
    %583 = vmatprep.mubr.f32.mxu0 0.0
    %584 = vmatmul.mubr.f32.gmra.mrb[0].mxu0 %v475
    %v585 = vpop.f32.mrb[0].mxu0
    %v586 = vadd.f32 0.0, %v585
    %v587 = vpop.f32.mrb[0].mxu0
    %588 = vmatprep.mubr.f32.mxu0 0.0
    %589 = vmatmul.mubr.f32.gmra.mrb[0].mxu0 %v476
    %v590 = vpop.f32.mrb[0].mxu0
    %v591 = vadd.f32 0.0, %v590
    %v592 = vpop.f32.mrb[0].mxu0
    %593 = vmatprep.mubr.f32.mxu0 0.0
    %594 = vmatmul.mubr.f32.gmra.mrb[0].mxu0 %v477
    %v595 = vpop.f32.mrb[0].mxu0
    %v596 = vadd.f32 0.0, %v595
    %v597 = vpop.f32.mrb[0].mxu0
    %598 = vmatprep.mubr.f32.mxu0 0.0
    %599 = vmatmul.mubr.f32.gmra.mrb[0].mxu0 %v478
    %v600 = vpop.f32.mrb[0].mxu0
    %v601 = vadd.f32 0.0, %v600
    %v602 = vpop.f32.mrb[0].mxu0
    %603 = vmatprep.mubr.f32.mxu0 0.0
    %604 = vmatmul.mubr.f32.gmra.mrb[0].mxu0 %v479
    %v605 = vpop.f32.mrb[0].mxu0
    %v606 = vadd.f32 0.0, %v605
    %v607 = vpop.f32.mrb[0].mxu0
    %608 = vmatprep.mubr.f32.mxu0 0.0
    %609 = vmatmul.mubr.f32.gmra.mrb[0].mxu0 %v480
    %v610 = vpop.f32.mrb[0].mxu0
    %v611 = vadd.f32 0.0, %v610
    %v612 = vpop.f32.mrb[0].mxu0
    %613 = vmatprep.mubr.f32.mxu0 0.0
    %614 = vmatmul.mubr.f32.gmra.mrb[0].mxu0 %v481
    %v615 = vpop.f32.mrb[0].mxu0
    %v616 = vadd.f32 0.0, %v615
    %v617 = vpop.f32.mrb[0].mxu0
    %618 = vmatprep.mubr.f32.mxu0 0.0
    %619 = vmatmul.mubr.f32.gmra.mrb[0].mxu0 %v482
    %v620 = vpop.f32.mrb[0].mxu0
    %v621 = vadd.f32 0.0, %v620
    %v622 = vpop.f32.mrb[0].mxu0
    %623 = vmatprep.mubr.f32.mxu0 0.0
    %624 = vmatmul.mubr.f32.gmra.mrb[0].mxu0 %v483
    %v625 = vpop.f32.mrb[0].mxu0
    %v626 = vadd.f32 0.0, %v625
    %v627 = vpop.f32.mrb[0].mxu0
    %628 = vmatprep.mubr.f32.mxu0 0.0
    %629 = vmatmul.mubr.f32.gmra.mrb[0].mxu0 %v484
    %v630 = vpop.f32.mrb[0].mxu0
    %v631 = vadd.f32 0.0, %v630
    %v632 = vpop.f32.mrb[0].mxu0
    %633 = vmatprep.mubr.f32.mxu0 0.0
    %634 = vmatmul.mubr.f32.gmra.mrb[0].mxu0 %v485
    %v635 = vpop.f32.mrb[0].mxu0
    %v636 = vadd.f32 0.0, %v635
    %v637 = vpop.f32.mrb[0].mxu0
    %638 = vmatprep.mubr.f32.mxu0 0.0
    %639 = vmatmul.mubr.f32.gmra.mrb[0].mxu0 %v486
    %v640 = vpop.f32.mrb[0].mxu0
    %v641 = vadd.f32 0.0, %v640
    %v642 = vpop.f32.mrb[0].mxu0
    %643 = vmatprep.mubr.f32.mxu0 0.0
    %644 = vmatmul.mubr.f32.gmra.mrb[0].mxu0 %v487
    %v645 = vpop.f32.mrb[0].mxu0
    %v646 = vadd.f32 0.0, %v645
    %v647 = vpop.f32.mrb[0].mxu0
    %648 = vmatprep.mubr.f32.mxu0 0.0
    %649 = vmatmul.mubr.f32.gmra.mrb[0].mxu0 %v488
    %v650 = vpop.f32.mrb[0].mxu0
    %v651 = vadd.f32 0.0, %v650
    %v652 = vpop.f32.mrb[0].mxu0
    %653 = vmatprep.mubr.f32.mxu0 0.0
    %654 = vmatmul.mubr.f32.gmra.mrb[0].mxu0 %v489
    %v655 = vpop.f32.mrb[0].mxu0
    %v656 = vadd.f32 0.0, %v655
    %v657 = vpop.f32.mrb[0].mxu0
    %658 = vmatprep.mubr.f32.mxu0 0.0
    %659 = vmatmul.mubr.f32.gmra.mrb[0].mxu0 %v490
    %v660 = vpop.f32.mrb[0].mxu0
    %v661 = vadd.f32 0.0, %v660
    %v662 = vpop.f32.mrb[0].mxu0
    %663 = vmatprep.mubr.f32.mxu0 0.0
    %664 = vmatmul.mubr.f32.gmra.mrb[0].mxu0 %v491
    %v665 = vpop.f32.mrb[0].mxu0
    %v666 = vadd.f32 0.0, %v665
    %v667 = vpop.f32.mrb[0].mxu0
    %668 = vmatprep.mubr.f32.mxu0 0.0
    %669 = vmatmul.mubr.f32.gmra.mrb[0].mxu0 %v492
    %v670 = vpop.f32.mrb[0].mxu0
    %v671 = vadd.f32 0.0, %v670
    %v672 = vpop.f32.mrb[0].mxu0
    %673 = vmatprep.mubr.f32.mxu0 0.0
    %674 = vmatmul.mubr.f32.gmra.mrb[0].mxu0 %v493
    %v675 = vpop.f32.mrb[0].mxu0
    %v676 = vadd.f32 0.0, %v675
    %v677 = vpop.f32.mrb[0].mxu0
    %678 = vmatprep.mubr.f32.mxu0 0.0
    %679 = vmatmul.mubr.f32.gmra.mrb[0].mxu0 %v494
    %v680 = vpop.f32.mrb[0].mxu0
    %v681 = vadd.f32 0.0, %v680
    %v682 = vpop.f32.mrb[0].mxu0
    %683 = vmatprep.mubr.f32.mxu0 0.0
    %684 = vmatmul.mubr.f32.gmra.mrb[0].mxu0 %v495
    %v685 = vpop.f32.mrb[0].mxu0
    %v686 = vadd.f32 0.0, %v685
    %v687 = vpop.f32.mrb[0].mxu0
    %688 = vmatprep.mubr.f32.mxu0 0.0
    %689 = vmatmul.mubr.f32.gmra.mrb[0].mxu0 %v496
    %v690 = vpop.f32.mrb[0].mxu0
    %v691 = vadd.f32 0.0, %v690
    %v692 = vpop.f32.mrb[0].mxu0
    %693 = vmatprep.mubr.f32.mxu0 0.0
    %694 = vmatmul.mubr.f32.gmra.mrb[0].mxu0 %v497
    %v695 = vpop.f32.mrb[0].mxu0
    %v696 = vadd.f32 0.0, %v695
    %v697 = vpop.f32.mrb[0].mxu0
    %698 = vmatprep.mubr.f32.mxu0 0.0
    %699 = vmatmul.mubr.f32.gmra.mrb[0].mxu0 %v498
    %v700 = vpop.f32.mrb[0].mxu0
    %v701 = vadd.f32 0.0, %v700
    %v702 = vpop.f32.mrb[0].mxu0
    %703 = vmatprep.mubr.f32.mxu0 0.0
    %704 = vmatmul.mubr.f32.gmra.mrb[0].mxu0 %v499
    %v705 = vpop.f32.mrb[0].mxu0
    %v706 = vadd.f32 0.0, %v705
    %v707 = vpop.f32.mrb[0].mxu0
    %708 = vmatprep.mubr.f32.mxu0 0.0
    %709 = vmatmul.mubr.f32.gmra.mrb[0].mxu0 %v500
    %v710 = vpop.f32.mrb[0].mxu0
    %v711 = vadd.f32 0.0, %v710
    %v712 = vpop.f32.mrb[0].mxu0
    %713 = vmatprep.mubr.f32.mxu0 0.0
    %714 = vmatmul.mubr.f32.gmra.mrb[0].mxu0 %v501
    %v715 = vpop.f32.mrb[0].mxu0
    %v716 = vadd.f32 0.0, %v715
    %v717 = vpop.f32.mrb[0].mxu0
    %718 = vmatprep.mubr.f32.mxu0 0.0
    %719 = vmatmul.mubr.f32.gmra.mrb[0].mxu0 %v502
    %v720 = vpop.f32.mrb[0].mxu0
    %v721 = vadd.f32 0.0, %v720
    %v722 = vpop.f32.mrb[0].mxu0
    %723 = vdwg.mxu0
    %v724 = vld [vmem:[#allocation13] sm:$0xff]
    %v725 = vld [vmem:[#allocation13 + $0x8] sm:$0xff]
    %v726 = vld [vmem:[#allocation13 + $0x10] sm:$0xff]
    %v727 = vld [vmem:[#allocation13 + $0x18] sm:$0xff]
    %v728 = vld [vmem:[#allocation13 + $0x20] sm:$0xff]
    %v729 = vld [vmem:[#allocation13 + $0x28] sm:$0xff]
    %v730 = vld [vmem:[#allocation13 + $0x30] sm:$0xff]
    %v731 = vld [vmem:[#allocation13 + $0x38] sm:$0xff]
    %v732 = vld [vmem:[#allocation13 + $0x40] sm:$0xff]
    %v733 = vld [vmem:[#allocation13 + $0x48] sm:$0xff]
    %v734 = vld [vmem:[#allocation13 + $0x50] sm:$0xff]
    %v735 = vld [vmem:[#allocation13 + $0x58] sm:$0xff]
    %v736 = vld [vmem:[#allocation13 + $0x60] sm:$0xff]
    %v737 = vld [vmem:[#allocation13 + $0x68] sm:$0xff]
    %v738 = vld [vmem:[#allocation13 + $0x70] sm:$0xff]
    %v739 = vld [vmem:[#allocation13 + $0x78] sm:$0xff]
    %v740 = vld [vmem:[#allocation13 + $0x80] sm:$0xff]
    %v741 = vld [vmem:[#allocation13 + $0x88] sm:$0xff]
    %v742 = vld [vmem:[#allocation13 + $0x90] sm:$0xff]
    %v743 = vld [vmem:[#allocation13 + $0x98] sm:$0xff]
    %v744 = vld [vmem:[#allocation13 + $0xa0] sm:$0xff]
    %v745 = vld [vmem:[#allocation13 + $0xa8] sm:$0xff]
    %v746 = vld [vmem:[#allocation13 + $0xb0] sm:$0xff]
    %v747 = vld [vmem:[#allocation13 + $0xb8] sm:$0xff]
    %v748 = vld [vmem:[#allocation13 + $0xc0] sm:$0xff]
    %v749 = vld [vmem:[#allocation13 + $0xc8] sm:$0xff]
    %v750 = vld [vmem:[#allocation13 + $0xd0] sm:$0xff]
    %v751 = vld [vmem:[#allocation13 + $0xd8] sm:$0xff]
    %vm752 = vcmp.gt.f32.partialorder %v586, %v724
    %vm753 = vcmp.gt.f32.partialorder %v591, %v725
    %vm754 = vcmp.gt.f32.partialorder %v596, %v726
    %vm755 = vcmp.gt.f32.partialorder %v601, %v727
    %vm756 = vcmp.gt.f32.partialorder %v606, %v728
    %vm757 = vcmp.gt.f32.partialorder %v611, %v729
    %vm758 = vcmp.gt.f32.partialorder %v616, %v730
    %vm759 = vcmp.gt.f32.partialorder %v621, %v731
    %vm760 = vcmp.gt.f32.partialorder %v626, %v732
    %vm761 = vcmp.gt.f32.partialorder %v631, %v733
    %vm762 = vcmp.gt.f32.partialorder %v636, %v734
    %vm763 = vcmp.gt.f32.partialorder %v641, %v735
    %vm764 = vcmp.gt.f32.partialorder %v646, %v736
    %vm765 = vcmp.gt.f32.partialorder %v651, %v737
    %vm766 = vcmp.gt.f32.partialorder %v656, %v738
    %vm767 = vcmp.gt.f32.partialorder %v661, %v739
    %vm768 = vcmp.gt.f32.partialorder %v666, %v740
    %vm769 = vcmp.gt.f32.partialorder %v671, %v741
    %vm770 = vcmp.gt.f32.partialorder %v676, %v742
    %vm771 = vcmp.gt.f32.partialorder %v681, %v743
    %vm772 = vcmp.gt.f32.partialorder %v686, %v744
    %vm773 = vcmp.gt.f32.partialorder %v691, %v745
    %vm774 = vcmp.gt.f32.partialorder %v696, %v746
    %vm775 = vcmp.gt.f32.partialorder %v701, %v747
    %vm776 = vcmp.gt.f32.partialorder %v706, %v748
    %vm777 = vcmp.gt.f32.partialorder %v711, %v749
    %vm778 = vcmp.gt.f32.partialorder %v716, %v750
    %vm779 = vcmp.gt.f32.partialorder %v721, %v751
    %v780 = vsel %vm752, 1, 0
    %v781 = vsel %vm753, 1, 0
    %v782 = vsel %vm754, 1, 0
    %v783 = vsel %vm755, 1, 0
    %v784 = vsel %vm756, 1, 0
    %v785 = vsel %vm757, 1, 0
    %v786 = vsel %vm758, 1, 0
    %v787 = vsel %vm759, 1, 0
    %v788 = vsel %vm760, 1, 0
    %v789 = vsel %vm761, 1, 0
    %v790 = vsel %vm762, 1, 0
    %v791 = vsel %vm763, 1, 0
    %v792 = vsel %vm764, 1, 0
    %v793 = vsel %vm765, 1, 0
    %v794 = vsel %vm766, 1, 0
    %v795 = vsel %vm767, 1, 0
    %v796 = vsel %vm768, 1, 0
    %v797 = vsel %vm769, 1, 0
    %v798 = vsel %vm770, 1, 0
    %v799 = vsel %vm771, 1, 0
    %v800 = vsel %vm772, 1, 0
    %v801 = vsel %vm773, 1, 0
    %v802 = vsel %vm774, 1, 0
    %v803 = vsel %vm775, 1, 0
    %v804 = vsel %vm776, 1, 0
    %v805 = vsel %vm777, 1, 0
    %v806 = vsel %vm778, 1, 0
    %v807 = vsel %vm779, 1, 0
    %v808 = vcvt.s32.f32 %v780
    %v809 = vcvt.s32.f32 %v781
    %v810 = vcvt.s32.f32 %v782
    %v811 = vcvt.s32.f32 %v783
    %v812 = vcvt.s32.f32 %v784
    %v813 = vcvt.s32.f32 %v785
    %v814 = vcvt.s32.f32 %v786
    %v815 = vcvt.s32.f32 %v787
    %v816 = vcvt.s32.f32 %v788
    %v817 = vcvt.s32.f32 %v789
    %v818 = vcvt.s32.f32 %v790
    %v819 = vcvt.s32.f32 %v791
    %v820 = vcvt.s32.f32 %v792
    %v821 = vcvt.s32.f32 %v793
    %v822 = vcvt.s32.f32 %v794
    %v823 = vcvt.s32.f32 %v795
    %v824 = vcvt.s32.f32 %v796
    %v825 = vcvt.s32.f32 %v797
    %v826 = vcvt.s32.f32 %v798
    %v827 = vcvt.s32.f32 %v799
    %v828 = vcvt.s32.f32 %v800
    %v829 = vcvt.s32.f32 %v801
    %v830 = vcvt.s32.f32 %v802
    %v831 = vcvt.s32.f32 %v803
    %v832 = vcvt.s32.f32 %v804
    %v833 = vcvt.s32.f32 %v805
    %v834 = vcvt.s32.f32 %v806
    %v835 = vcvt.s32.f32 %v807
    %v836 = vld [vmem:[#allocation8] sm:$0xff]
    %v837 = vld [vmem:[#allocation8 + $0x8] sm:$0xff]
    %v838 = vld [vmem:[#allocation8 + $0x10] sm:$0xff]
    %v839 = vld [vmem:[#allocation8 + $0x18] sm:$0xff]
    %v840 = vld [vmem:[#allocation8 + $0x20] sm:$0xff]
    %v841 = vld [vmem:[#allocation8 + $0x28] sm:$0xff]
    %v842 = vld [vmem:[#allocation8 + $0x30] sm:$0xff]
    %v843 = vld [vmem:[#allocation8 + $0x38] sm:$0xff]
    %v844 = vld [vmem:[#allocation8 + $0x40] sm:$0xff]
    %v845 = vld [vmem:[#allocation8 + $0x48] sm:$0xff]
    %v846 = vld [vmem:[#allocation8 + $0x50] sm:$0xff]
    %v847 = vld [vmem:[#allocation8 + $0x58] sm:$0xff]
    %v848 = vld [vmem:[#allocation8 + $0x60] sm:$0xff]
    %v849 = vld [vmem:[#allocation8 + $0x68] sm:$0xff]
    %v850 = vld [vmem:[#allocation8 + $0x70] sm:$0xff]
    %v851 = vld [vmem:[#allocation8 + $0x78] sm:$0xff]
    %852 = vmatprep.subr.mxu0 0.0
    %853 = vmatpush1.msra.mxu0 %v836
    %854 = vmatprep.subr.mxu0 0.0
    %855 = vmatpush1.msra.mxu0 %v837
    %856 = vmatprep.subr.mxu0 0.0
    %857 = vmatpush1.msra.mxu0 %v838
    %858 = vmatprep.subr.mxu0 0.0
    %859 = vmatpush1.msra.mxu0 %v839
    %860 = vmatprep.subr.mxu0 0.0
    %861 = vmatpush1.msra.mxu0 %v840
    %862 = vmatprep.subr.mxu0 0.0
    %863 = vmatpush1.msra.mxu0 %v841
    %864 = vmatprep.subr.mxu0 0.0
    %865 = vmatpush1.msra.mxu0 %v842
    %866 = vmatprep.subr.mxu0 0.0
    %867 = vmatpush1.msra.mxu0 %v843
    %868 = vmatprep.subr.mxu0 0.0
    %869 = vmatpush1.msra.mxu0 %v844
    %870 = vmatprep.subr.mxu0 0.0
    %871 = vmatpush1.msra.mxu0 %v845
    %872 = vmatprep.subr.mxu0 0.0
    %873 = vmatpush1.msra.mxu0 %v846
    %874 = vmatprep.subr.mxu0 0.0
    %875 = vmatpush1.msra.mxu0 %v847
    %876 = vmatprep.subr.mxu0 0.0
    %877 = vmatpush1.msra.mxu0 %v848
    %878 = vmatprep.subr.mxu0 0.0
    %879 = vmatpush1.msra.mxu0 %v849
    %880 = vmatprep.subr.mxu0 0.0
    %881 = vmatpush1.msra.mxu0 %v850
    %882 = vmatprep.subr.mxu0 0.0
    %883 = vmatpush1.msra.mxu0 %v851
    %884 = vmatprep.subr.mxu0 0.0
    %885 = vmatpush1.msra.mxu0 0.0
    %886 = vmatprep.subr.mxu0 0.0
    %887 = vmatpush1.msra.mxu0 0.0
    %888 = vmatprep.subr.mxu0 0.0
    %889 = vmatpush1.msra.mxu0 0.0
    %890 = vmatprep.subr.mxu0 0.0
    %891 = vmatpush1.msra.mxu0 0.0
    %892 = vmatprep.subr.mxu0 0.0
    %893 = vmatpush1.msra.mxu0 0.0
    %894 = vmatprep.subr.mxu0 0.0
    %895 = vmatpush1.msra.mxu0 0.0
    %896 = vmatprep.subr.mxu0 0.0
    %897 = vmatpush1.msra.mxu0 0.0
    %898 = vmatprep.subr.mxu0 0.0
    %899 = vmatpush1.msra.mxu0 0.0
    %900 = vmatprep.subr.mxu0 0.0
    %901 = vmatpush1.msra.mxu0 0.0
    %902 = vmatprep.subr.mxu0 0.0
    %903 = vmatpush1.msra.mxu0 0.0
    %904 = vmatprep.subr.mxu0 0.0
    %905 = vmatpush1.msra.mxu0 0.0
    %906 = vmatprep.subr.mxu0 0.0
    %907 = vmatpush1.msra.mxu0 0.0
    %908 = vmatprep.subr.mxu0 0.0
    %909 = vmatpush1.msra.mxu0 0.0
    %910 = vmatprep.subr.mxu0 0.0
    %911 = vmatpush1.msra.mxu0 0.0
    %912 = vmatprep.subr.mxu0 0.0
    %913 = vmatpush1.msra.mxu0 0.0
    %914 = vmatprep.subr.mxu0 0.0
    %915 = vmatpush1.msra.mxu0 0.0
    %916 = vmatprep.mubr.f32.mxu0 0.0
    %917 = vmatmul.mubr.f32.gmra.mrb[0].mxu0 %v808
    %v918 = vpop.f32.mrb[0].mxu0
    %v919 = vadd.f32 0.0, %v918
    %v920 = vpop.f32.mrb[0].mxu0
    %921 = vmatprep.mubr.f32.mxu0 0.0
    %922 = vmatmul.mubr.f32.gmra.mrb[0].mxu0 %v809
    %v923 = vpop.f32.mrb[0].mxu0
    %v924 = vadd.f32 0.0, %v923
    %v925 = vpop.f32.mrb[0].mxu0
    %926 = vmatprep.mubr.f32.mxu0 0.0
    %927 = vmatmul.mubr.f32.gmra.mrb[0].mxu0 %v810
    %v928 = vpop.f32.mrb[0].mxu0
    %v929 = vadd.f32 0.0, %v928
    %v930 = vpop.f32.mrb[0].mxu0
    %931 = vmatprep.mubr.f32.mxu0 0.0
    %932 = vmatmul.mubr.f32.gmra.mrb[0].mxu0 %v811
    %v933 = vpop.f32.mrb[0].mxu0
    %v934 = vadd.f32 0.0, %v933
    %v935 = vpop.f32.mrb[0].mxu0
    %936 = vmatprep.mubr.f32.mxu0 0.0
    %937 = vmatmul.mubr.f32.gmra.mrb[0].mxu0 %v812
    %v938 = vpop.f32.mrb[0].mxu0
    %v939 = vadd.f32 0.0, %v938
    %v940 = vpop.f32.mrb[0].mxu0
    %941 = vmatprep.mubr.f32.mxu0 0.0
    %942 = vmatmul.mubr.f32.gmra.mrb[0].mxu0 %v813
    %v943 = vpop.f32.mrb[0].mxu0
    %v944 = vadd.f32 0.0, %v943
    %v945 = vpop.f32.mrb[0].mxu0
    %946 = vmatprep.mubr.f32.mxu0 0.0
    %947 = vmatmul.mubr.f32.gmra.mrb[0].mxu0 %v814
    %v948 = vpop.f32.mrb[0].mxu0
    %v949 = vadd.f32 0.0, %v948
    %v950 = vpop.f32.mrb[0].mxu0
    %951 = vmatprep.mubr.f32.mxu0 0.0
    %952 = vmatmul.mubr.f32.gmra.mrb[0].mxu0 %v815
    %v953 = vpop.f32.mrb[0].mxu0
    %v954 = vadd.f32 0.0, %v953
    %v955 = vpop.f32.mrb[0].mxu0
    %956 = vmatprep.mubr.f32.mxu0 0.0
    %957 = vmatmul.mubr.f32.gmra.mrb[0].mxu0 %v816
    %v958 = vpop.f32.mrb[0].mxu0
    %v959 = vadd.f32 0.0, %v958
    %v960 = vpop.f32.mrb[0].mxu0
    %961 = vmatprep.mubr.f32.mxu0 0.0
    %962 = vmatmul.mubr.f32.gmra.mrb[0].mxu0 %v817
    %v963 = vpop.f32.mrb[0].mxu0
    %v964 = vadd.f32 0.0, %v963
    %v965 = vpop.f32.mrb[0].mxu0
    %966 = vmatprep.mubr.f32.mxu0 0.0
    %967 = vmatmul.mubr.f32.gmra.mrb[0].mxu0 %v818
    %v968 = vpop.f32.mrb[0].mxu0
    %v969 = vadd.f32 0.0, %v968
    %v970 = vpop.f32.mrb[0].mxu0
    %971 = vmatprep.mubr.f32.mxu0 0.0
    %972 = vmatmul.mubr.f32.gmra.mrb[0].mxu0 %v819
    %v973 = vpop.f32.mrb[0].mxu0
    %v974 = vadd.f32 0.0, %v973
    %v975 = vpop.f32.mrb[0].mxu0
    %976 = vmatprep.mubr.f32.mxu0 0.0
    %977 = vmatmul.mubr.f32.gmra.mrb[0].mxu0 %v820
    %v978 = vpop.f32.mrb[0].mxu0
    %v979 = vadd.f32 0.0, %v978
    %v980 = vpop.f32.mrb[0].mxu0
    %981 = vmatprep.mubr.f32.mxu0 0.0
    %982 = vmatmul.mubr.f32.gmra.mrb[0].mxu0 %v821
    %v983 = vpop.f32.mrb[0].mxu0
    %v984 = vadd.f32 0.0, %v983
    %v985 = vpop.f32.mrb[0].mxu0
    %986 = vmatprep.mubr.f32.mxu0 0.0
    %987 = vmatmul.mubr.f32.gmra.mrb[0].mxu0 %v822
    %v988 = vpop.f32.mrb[0].mxu0
    %v989 = vadd.f32 0.0, %v988
    %v990 = vpop.f32.mrb[0].mxu0
    %991 = vmatprep.mubr.f32.mxu0 0.0
    %992 = vmatmul.mubr.f32.gmra.mrb[0].mxu0 %v823
    %v993 = vpop.f32.mrb[0].mxu0
    %v994 = vadd.f32 0.0, %v993
    %v995 = vpop.f32.mrb[0].mxu0
    %996 = vmatprep.mubr.f32.mxu0 0.0
    %997 = vmatmul.mubr.f32.gmra.mrb[0].mxu0 %v824
    %v998 = vpop.f32.mrb[0].mxu0
    %v999 = vadd.f32 0.0, %v998
    %v1000 = vpop.f32.mrb[0].mxu0
    %1001 = vmatprep.mubr.f32.mxu0 0.0
    %1002 = vmatmul.mubr.f32.gmra.mrb[0].mxu0 %v825
    %v1003 = vpop.f32.mrb[0].mxu0
    %v1004 = vadd.f32 0.0, %v1003
    %v1005 = vpop.f32.mrb[0].mxu0
    %1006 = vmatprep.mubr.f32.mxu0 0.0
    %1007 = vmatmul.mubr.f32.gmra.mrb[0].mxu0 %v826
    %v1008 = vpop.f32.mrb[0].mxu0
    %v1009 = vadd.f32 0.0, %v1008
    %v1010 = vpop.f32.mrb[0].mxu0
    %1011 = vmatprep.mubr.f32.mxu0 0.0
    %1012 = vmatmul.mubr.f32.gmra.mrb[0].mxu0 %v827
    %v1013 = vpop.f32.mrb[0].mxu0
    %v1014 = vadd.f32 0.0, %v1013
    %v1015 = vpop.f32.mrb[0].mxu0
    %1016 = vmatprep.mubr.f32.mxu0 0.0
    %1017 = vmatmul.mubr.f32.gmra.mrb[0].mxu0 %v828
    %v1018 = vpop.f32.mrb[0].mxu0
    %v1019 = vadd.f32 0.0, %v1018
    %v1020 = vpop.f32.mrb[0].mxu0
    %1021 = vmatprep.mubr.f32.mxu0 0.0
    %1022 = vmatmul.mubr.f32.gmra.mrb[0].mxu0 %v829
    %v1023 = vpop.f32.mrb[0].mxu0
    %v1024 = vadd.f32 0.0, %v1023
    %v1025 = vpop.f32.mrb[0].mxu0
    %1026 = vmatprep.mubr.f32.mxu0 0.0
    %1027 = vmatmul.mubr.f32.gmra.mrb[0].mxu0 %v830
    %v1028 = vpop.f32.mrb[0].mxu0
    %v1029 = vadd.f32 0.0, %v1028
    %v1030 = vpop.f32.mrb[0].mxu0
    %1031 = vmatprep.mubr.f32.mxu0 0.0
    %1032 = vmatmul.mubr.f32.gmra.mrb[0].mxu0 %v831
    %v1033 = vpop.f32.mrb[0].mxu0
    %v1034 = vadd.f32 0.0, %v1033
    %v1035 = vpop.f32.mrb[0].mxu0
    %1036 = vmatprep.mubr.f32.mxu0 0.0
    %1037 = vmatmul.mubr.f32.gmra.mrb[0].mxu0 %v832
    %v1038 = vpop.f32.mrb[0].mxu0
    %v1039 = vadd.f32 0.0, %v1038
    %v1040 = vpop.f32.mrb[0].mxu0
    %1041 = vmatprep.mubr.f32.mxu0 0.0
    %1042 = vmatmul.mubr.f32.gmra.mrb[0].mxu0 %v833
    %v1043 = vpop.f32.mrb[0].mxu0
    %v1044 = vadd.f32 0.0, %v1043
    %v1045 = vpop.f32.mrb[0].mxu0
    %1046 = vmatprep.mubr.f32.mxu0 0.0
    %1047 = vmatmul.mubr.f32.gmra.mrb[0].mxu0 %v834
    %v1048 = vpop.f32.mrb[0].mxu0
    %v1049 = vadd.f32 0.0, %v1048
    %v1050 = vpop.f32.mrb[0].mxu0
    %1051 = vmatprep.mubr.f32.mxu0 0.0
    %1052 = vmatmul.mubr.f32.gmra.mrb[0].mxu0 %v835
    %v1053 = vpop.f32.mrb[0].mxu0
    %v1054 = vadd.f32 0.0, %v1053
    %v1055 = vpop.f32.mrb[0].mxu0
    %1056 = vdwg.mxu0
    %v1057 = vld [vmem:[#allocation14] sm:$0xff]
    %v1058 = vld [vmem:[#allocation14 + $0x8] sm:$0xff]
    %v1059 = vld [vmem:[#allocation14 + $0x10] sm:$0xff]
    %v1060 = vld [vmem:[#allocation14 + $0x18] sm:$0xff]
    %v1061 = vld [vmem:[#allocation14 + $0x20] sm:$0xff]
    %v1062 = vld [vmem:[#allocation14 + $0x28] sm:$0xff]
    %v1063 = vld [vmem:[#allocation14 + $0x30] sm:$0xff]
    %v1064 = vld [vmem:[#allocation14 + $0x38] sm:$0xff]
    %v1065 = vld [vmem:[#allocation14 + $0x40] sm:$0xff]
    %v1066 = vld [vmem:[#allocation14 + $0x48] sm:$0xff]
    %v1067 = vld [vmem:[#allocation14 + $0x50] sm:$0xff]
    %v1068 = vld [vmem:[#allocation14 + $0x58] sm:$0xff]
    %v1069 = vld [vmem:[#allocation14 + $0x60] sm:$0xff]
    %v1070 = vld [vmem:[#allocation14 + $0x68] sm:$0xff]
    %v1071 = vld [vmem:[#allocation14 + $0x70] sm:$0xff]
    %v1072 = vld [vmem:[#allocation14 + $0x78] sm:$0xff]
    %v1073 = vld [vmem:[#allocation14 + $0x80] sm:$0xff]
    %v1074 = vld [vmem:[#allocation14 + $0x88] sm:$0xff]
    %v1075 = vld [vmem:[#allocation14 + $0x90] sm:$0xff]
    %v1076 = vld [vmem:[#allocation14 + $0x98] sm:$0xff]
    %v1077 = vld [vmem:[#allocation14 + $0xa0] sm:$0xff]
    %v1078 = vld [vmem:[#allocation14 + $0xa8] sm:$0xff]
    %v1079 = vld [vmem:[#allocation14 + $0xb0] sm:$0xff]
    %v1080 = vld [vmem:[#allocation14 + $0xb8] sm:$0xff]
    %v1081 = vld [vmem:[#allocation14 + $0xc0] sm:$0xff]
    %v1082 = vld [vmem:[#allocation14 + $0xc8] sm:$0xff]
    %v1083 = vld [vmem:[#allocation14 + $0xd0] sm:$0xff]
    %v1084 = vld [vmem:[#allocation14 + $0xd8] sm:$0xff]
    %vm1085 = vcmp.gt.f32.partialorder %v919, %v1057
    %vm1086 = vcmp.gt.f32.partialorder %v924, %v1058
    %vm1087 = vcmp.gt.f32.partialorder %v929, %v1059
    %vm1088 = vcmp.gt.f32.partialorder %v934, %v1060
    %vm1089 = vcmp.gt.f32.partialorder %v939, %v1061
    %vm1090 = vcmp.gt.f32.partialorder %v944, %v1062
    %vm1091 = vcmp.gt.f32.partialorder %v949, %v1063
    %vm1092 = vcmp.gt.f32.partialorder %v954, %v1064
    %vm1093 = vcmp.gt.f32.partialorder %v959, %v1065
    %vm1094 = vcmp.gt.f32.partialorder %v964, %v1066
    %vm1095 = vcmp.gt.f32.partialorder %v969, %v1067
    %vm1096 = vcmp.gt.f32.partialorder %v974, %v1068
    %vm1097 = vcmp.gt.f32.partialorder %v979, %v1069
    %vm1098 = vcmp.gt.f32.partialorder %v984, %v1070
    %vm1099 = vcmp.gt.f32.partialorder %v989, %v1071
    %vm1100 = vcmp.gt.f32.partialorder %v994, %v1072
    %vm1101 = vcmp.gt.f32.partialorder %v999, %v1073
    %vm1102 = vcmp.gt.f32.partialorder %v1004, %v1074
    %vm1103 = vcmp.gt.f32.partialorder %v1009, %v1075
    %vm1104 = vcmp.gt.f32.partialorder %v1014, %v1076
    %vm1105 = vcmp.gt.f32.partialorder %v1019, %v1077
    %vm1106 = vcmp.gt.f32.partialorder %v1024, %v1078
    %vm1107 = vcmp.gt.f32.partialorder %v1029, %v1079
    %vm1108 = vcmp.gt.f32.partialorder %v1034, %v1080
    %vm1109 = vcmp.gt.f32.partialorder %v1039, %v1081
    %vm1110 = vcmp.gt.f32.partialorder %v1044, %v1082
    %vm1111 = vcmp.gt.f32.partialorder %v1049, %v1083
    %vm1112 = vcmp.gt.f32.partialorder %v1054, %v1084
    %v1113 = vsel %vm1085, 1, 0
    %v1114 = vsel %vm1086, 1, 0
    %v1115 = vsel %vm1087, 1, 0
    %v1116 = vsel %vm1088, 1, 0
    %v1117 = vsel %vm1089, 1, 0
    %v1118 = vsel %vm1090, 1, 0
    %v1119 = vsel %vm1091, 1, 0
    %v1120 = vsel %vm1092, 1, 0
    %v1121 = vsel %vm1093, 1, 0
    %v1122 = vsel %vm1094, 1, 0
    %v1123 = vsel %vm1095, 1, 0
    %v1124 = vsel %vm1096, 1, 0
    %v1125 = vsel %vm1097, 1, 0
    %v1126 = vsel %vm1098, 1, 0
    %v1127 = vsel %vm1099, 1, 0
    %v1128 = vsel %vm1100, 1, 0
    %v1129 = vsel %vm1101, 1, 0
    %v1130 = vsel %vm1102, 1, 0
    %v1131 = vsel %vm1103, 1, 0
    %v1132 = vsel %vm1104, 1, 0
    %v1133 = vsel %vm1105, 1, 0
    %v1134 = vsel %vm1106, 1, 0
    %v1135 = vsel %vm1107, 1, 0
    %v1136 = vsel %vm1108, 1, 0
    %v1137 = vsel %vm1109, 1, 0
    %v1138 = vsel %vm1110, 1, 0
    %v1139 = vsel %vm1111, 1, 0
    %v1140 = vsel %vm1112, 1, 0
    %v1141 = vcvt.s32.f32 %v1113
    %v1142 = vcvt.s32.f32 %v1114
    %v1143 = vcvt.s32.f32 %v1115
    %v1144 = vcvt.s32.f32 %v1116
    %v1145 = vcvt.s32.f32 %v1117
    %v1146 = vcvt.s32.f32 %v1118
    %v1147 = vcvt.s32.f32 %v1119
    %v1148 = vcvt.s32.f32 %v1120
    %v1149 = vcvt.s32.f32 %v1121
    %v1150 = vcvt.s32.f32 %v1122
    %v1151 = vcvt.s32.f32 %v1123
    %v1152 = vcvt.s32.f32 %v1124
    %v1153 = vcvt.s32.f32 %v1125
    %v1154 = vcvt.s32.f32 %v1126
    %v1155 = vcvt.s32.f32 %v1127
    %v1156 = vcvt.s32.f32 %v1128
    %v1157 = vcvt.s32.f32 %v1129
    %v1158 = vcvt.s32.f32 %v1130
    %v1159 = vcvt.s32.f32 %v1131
    %v1160 = vcvt.s32.f32 %v1132
    %v1161 = vcvt.s32.f32 %v1133
    %v1162 = vcvt.s32.f32 %v1134
    %v1163 = vcvt.s32.f32 %v1135
    %v1164 = vcvt.s32.f32 %v1136
    %v1165 = vcvt.s32.f32 %v1137
    %v1166 = vcvt.s32.f32 %v1138
    %v1167 = vcvt.s32.f32 %v1139
    %v1168 = vcvt.s32.f32 %v1140
    %v1169 = vadd.f32 %v1141, %v1142
    %v1170 = vadd.f32 %v1169, %v1143
    %v1171 = vadd.f32 %v1170, %v1144
    %v1172 = vadd.f32 %v1171, %v1145
    %v1173 = vadd.f32 %v1172, %v1146
    %v1174 = vadd.f32 %v1173, %v1147
    %v1175 = vadd.f32 %v1174, %v1148
    %v1176 = vadd.f32 %v1175, %v1149
    %v1177 = vadd.f32 %v1176, %v1150
    %v1178 = vadd.f32 %v1177, %v1151
    %v1179 = vadd.f32 %v1178, %v1152
    %v1180 = vadd.f32 %v1179, %v1153
    %v1181 = vadd.f32 %v1180, %v1154
    %v1182 = vadd.f32 %v1181, %v1155
    %v1183 = vadd.f32 %v1182, %v1156
    %v1184 = vadd.f32 %v1183, %v1157
    %v1185 = vadd.f32 %v1184, %v1158
    %v1186 = vadd.f32 %v1185, %v1159
    %v1187 = vadd.f32 %v1186, %v1160
    %v1188 = vadd.f32 %v1187, %v1161
    %v1189 = vadd.f32 %v1188, %v1162
    %v1190 = vadd.f32 %v1189, %v1163
    %v1191 = vadd.f32 %v1190, %v1164
    %v1192 = vadd.f32 %v1191, %v1165
    %v1193 = vadd.f32 %v1192, %v1166
    %v1194 = vadd.f32 %v1193, %v1167
    %v1195 = vadd.f32 %v1194, %v1168
    %v1196 = vld [vmem:[#allocation10] sm:$0xff]
    %v1197 = vld [vmem:[#allocation10 + $0x8] sm:$0xff]
    %v1198 = vld [vmem:[#allocation10 + $0x10] sm:$0xff]
    %v1199 = vld [vmem:[#allocation10 + $0x18] sm:$0xff]
    %v1200 = vld [vmem:[#allocation10 + $0x20] sm:$0xff]
    %v1201 = vld [vmem:[#allocation10 + $0x28] sm:$0xff]
    %v1202 = vld [vmem:[#allocation10 + $0x30] sm:$0xff]
    %v1203 = vld [vmem:[#allocation10 + $0x38] sm:$0xff]
    %v1204 = vld [vmem:[#allocation10 + $0x40] sm:$0xff]
    %v1205 = vld [vmem:[#allocation10 + $0x48] sm:$0xff]
    %v1206 = vld [vmem:[#allocation10 + $0x50] sm:$0xff]
    %v1207 = vld [vmem:[#allocation10 + $0x58] sm:$0xff]
    %v1208 = vld [vmem:[#allocation10 + $0x60] sm:$0xff]
    %v1209 = vld [vmem:[#allocation10 + $0x68] sm:$0xff]
    %v1210 = vld [vmem:[#allocation10 + $0x70] sm:$0xff]
    %v1211 = vld [vmem:[#allocation10 + $0x78] sm:$0xff]
    %v1212 = vld [vmem:[%s8] sm:$0x1]
    %v1213 = vmul.f32 %v1212, 28.0
    %v1215 = vlaneseq
    %v1216 = vshrl.u32 %v1215, 7
    %v1217 = vsub.s32 0, %v1216
    %v1218 = vrot.slane %v1213, %v1217
    %1220 = vmatprep.subr.mxu0 0.0
    %1221 = vmatpush1.msra.mxu0 %v1196
    %1222 = vmatprep.subr.mxu0 0.0
    %1223 = vmatpush1.msra.mxu0 %v1197
    %1224 = vmatprep.subr.mxu0 0.0
    %1225 = vmatpush1.msra.mxu0 %v1198
    %1226 = vmatprep.subr.mxu0 0.0
    %1227 = vmatpush1.msra.mxu0 %v1199
    %1228 = vmatprep.subr.mxu0 0.0
    %1229 = vmatpush1.msra.mxu0 %v1200
    %1230 = vmatprep.subr.mxu0 0.0
    %1231 = vmatpush1.msra.mxu0 %v1201
    %1232 = vmatprep.subr.mxu0 0.0
    %1233 = vmatpush1.msra.mxu0 %v1202
    %1234 = vmatprep.subr.mxu0 0.0
    %1235 = vmatpush1.msra.mxu0 %v1203
    %1236 = vmatprep.subr.mxu0 0.0
    %1237 = vmatpush1.msra.mxu0 %v1204
    %1238 = vmatprep.subr.mxu0 0.0
    %1239 = vmatpush1.msra.mxu0 %v1205
    %1240 = vmatprep.subr.mxu0 0.0
    %1241 = vmatpush1.msra.mxu0 %v1206
    %1242 = vmatprep.subr.mxu0 0.0
    %1243 = vmatpush1.msra.mxu0 %v1207
    %1244 = vmatprep.subr.mxu0 0.0
    %1245 = vmatpush1.msra.mxu0 %v1208
    %1246 = vmatprep.subr.mxu0 0.0
    %1247 = vmatpush1.msra.mxu0 %v1209
    %1248 = vmatprep.subr.mxu0 0.0
    %1249 = vmatpush1.msra.mxu0 %v1210
    %1250 = vmatprep.subr.mxu0 0.0
    %1251 = vmatpush1.msra.mxu0 %v1211
    %1252 = vmatprep.subr.mxu0 0.0
    %1253 = vmatpush1.msra.mxu0 0.0
    %1254 = vmatprep.subr.mxu0 0.0
    %1255 = vmatpush1.msra.mxu0 0.0
    %1256 = vmatprep.subr.mxu0 0.0
    %1257 = vmatpush1.msra.mxu0 0.0
    %1258 = vmatprep.subr.mxu0 0.0
    %1259 = vmatpush1.msra.mxu0 0.0
    %1260 = vmatprep.subr.mxu0 0.0
    %1261 = vmatpush1.msra.mxu0 0.0
    %1262 = vmatprep.subr.mxu0 0.0
    %1263 = vmatpush1.msra.mxu0 0.0
    %1264 = vmatprep.subr.mxu0 0.0
    %1265 = vmatpush1.msra.mxu0 0.0
    %1266 = vmatprep.subr.mxu0 0.0
    %1267 = vmatpush1.msra.mxu0 0.0
    %1268 = vmatprep.subr.mxu0 0.0
    %1269 = vmatpush1.msra.mxu0 0.0
    %1270 = vmatprep.subr.mxu0 0.0
    %1271 = vmatpush1.msra.mxu0 0.0
    %1272 = vmatprep.subr.mxu0 0.0
    %1273 = vmatpush1.msra.mxu0 0.0
    %1274 = vmatprep.subr.mxu0 0.0
    %1275 = vmatpush1.msra.mxu0 0.0
    %1276 = vmatprep.subr.mxu0 0.0
    %1277 = vmatpush1.msra.mxu0 0.0
    %1278 = vmatprep.subr.mxu0 0.0
    %1279 = vmatpush1.msra.mxu0 0.0
    %1280 = vmatprep.subr.mxu0 0.0
    %1281 = vmatpush1.msra.mxu0 0.0
    %1282 = vmatprep.subr.mxu0 0.0
    %1283 = vmatpush1.msra.mxu0 0.0
    %1284 = vmatprep.mubr.f32.mxu0 0.0
    %1285 = vmatmul.mubr.f32.gmra.mrb[0].mxu0 %v1195
    %v1286 = vpop.f32.mrb[0].mxu0
    %v1287 = vadd.f32 %v1218, %v1286
    %v1288 = vpop.f32.mrb[0].mxu0
    %1289 = vdwg.mxu0
    %1290 = vst [vmem:[#allocation16] sm:$0xff] %v1287
    // Predicated region
    $region70: #{tpu_custom_call.1} parent=1 // pred_check
      _
    $region71: #{tpu_custom_call.1} parent=1 // pred_check_branch
      %1292 = sbr.rel (0) target = $region73
    $region72: #{tpu_custom_call.1} parent=1 // pred_region
      %s1294 = ssub.s32 128, 128
      %1295 = vsyncadd [#allocation4], %s1294
      %s1297 = sshll.u32 [#allocation16], 4
      %s1298 = int_to_ptr.vmem [resolvable:$true] %s1297
      %1300 = dma.vmem_to_hbm [thread:$0]  %s1298, 128, %s9, [#allocation4]
    $region73: #{tpu_custom_call.1} parent=1 // pred_fallthru
      _
    // Predicated region
    $region74: #{tpu_custom_call.1} parent=1 // pred_check
      _
    $region75: #{tpu_custom_call.1} parent=1 // pred_check_branch
      %1302 = sbr.rel (0) target = $region77
    $region76: #{tpu_custom_call.1} parent=1 // pred_region
      %1303 = dma.done [#allocation4], 128
    $region77: #{tpu_custom_call.1} parent=1 // pred_fallthru
      _
    %1304 = vsyncpa [#allocation3], 1
    %1305 = vsyncpa [#allocation6], 1
    %1306 = vsyncpa [#allocation9], 1
    %1307 = vsyncpa [#allocation12], 1
    %1308 = vsyncpa [#allocation15], 1
    %1309 = vsyncpa [#allocation4], 1

</llo_original>
